<compile_context>
chip_gen: v7x
topology: tpu7x:2x2x1
jax: 0.10.0
libtpu: 0.0.40
codegen_flags: <defaults>
</compile_context>

<pallas_src>
import math
import functools

import jax
import jax.numpy as jnp
from jax import lax
from jax.experimental import pallas as pl
from jax.experimental.pallas import tpu as pltpu


# ------------------------------- kernel ------------------------------------ #

def _vit_block_kernel(x_ref, wqkv_ref, bqkv_ref, wp_ref, bp_ref,
                      w1_ref, b1_ref, w2_ref, b2_ref, o_ref, oheads_ref,
                      *, num_heads, head_dim, eps):
    """Fused ViTBlock forward for ONE batch element (grid steps over batch).

    x_ref   : (N, D) f32 tokens of this batch element.
    wqkv    : (D, 3D) bf16 with 1/sqrt(head_dim) folded into the q third.
    bqkv    : (1, 3D) f32 (scale folded into the q third as well).
    wp      : (D, D) bf16, w1 : (D, H) bf16, w2 : (H, D) bf16; biases (1, feat) f32.
    o_ref   : (N, D) f32.
    oheads_ref : (N, D) bf16 VMEM scratch collecting per-head attention outputs.
    """
    N, D = x_ref.shape

    x = x_ref[...]                                               # (N, D) f32

    # ---- norm1: LayerNorm(elementwise_affine=False, eps=1e-6), f32 ----
    mu = jnp.mean(x, axis=-1, keepdims=True)
    xc = x - mu
    var = jnp.mean(xc * xc, axis=-1, keepdims=True)
    xn = xc * lax.rsqrt(var + eps)
    xn_bf = xn.astype(jnp.bfloat16)                              # matmul-boundary cast

    # ---- fused qkv projection: one lane-dense (N, 3D) matmul ----
    qkv = jnp.dot(xn_bf, wqkv_ref[...],
                  preferred_element_type=jnp.float32) + bqkv_ref[...]
    qkv_bf = qkv.astype(jnp.bfloat16)

    # ---- per-head attention (unmasked, this batch element only) ----
    # Static loop == fori_loop(unroll=True) at 4 heads; head outputs land in the
    # oheads scratch at their lane offset so the output projection is ONE K=D matmul.
    for h in range(num_heads):
        lo = h * head_dim
        qh = qkv_bf[:, lo:lo + head_dim]                         # (N, hd) bf16 (pre-scaled)
        kh = qkv_bf[:, D + lo:D + lo + head_dim]
        vh = qkv_bf[:, 2 * D + lo:2 * D + lo + head_dim]
        # scores = q @ k^T (contract head_dim, no explicit transpose), f32 accum
        s = lax.dot_general(qh, kh, (((1,), (1,)), ((), ())),
                            preferred_element_type=jnp.float32)  # (N, N)
        s = s - jnp.max(s, axis=-1, keepdims=True)
        p = jnp.exp(s)
        p = p * pl.reciprocal(jnp.sum(p, axis=-1, keepdims=True), approx=True)
        oh = jnp.dot(p.astype(jnp.bfloat16), vh,
                     preferred_element_type=jnp.float32)         # (N, hd)
        oheads_ref[:, lo:lo + head_dim] = oh.astype(jnp.bfloat16)

    # ---- single output projection (K = D) + residual ----
    attn = jnp.dot(oheads_ref[...], wp_ref[...],
                   preferred_element_type=jnp.float32) + bp_ref[...]
    x1 = x + attn

    # ---- norm2 + Mlp (tanh GELU, f32 elementwise) + residual ----
    mu2 = jnp.mean(x1, axis=-1, keepdims=True)
    xc2 = x1 - mu2
    var2 = jnp.mean(xc2 * xc2, axis=-1, keepdims=True)
    xn2_bf = (xc2 * lax.rsqrt(var2 + eps)).astype(jnp.bfloat16)

    hdn = jnp.dot(xn2_bf, w1_ref[...],
                  preferred_element_type=jnp.float32) + b1_ref[...]
    g = 0.5 * hdn * (1.0 + jnp.tanh(math.sqrt(2.0 / math.pi) *
                                    (hdn + 0.044715 * hdn * hdn * hdn)))
    y = jnp.dot(g.astype(jnp.bfloat16), w2_ref[...],
                preferred_element_type=jnp.float32) + b2_ref[...]

    o_ref[...] = x1 + y


# ------------------------------ wrappers ------------------------------------ #

def prepare_kernel_params(raw_params, num_heads):
    """One-time host-side parameter transform:
    keep qkv fused, fold 1/sqrt(head_dim) into its q third, reshape biases,
    store weights as bf16 (biases stay f32, added after f32 accumulation)."""
    wqkv, bqkv, wp, bp, w1, b1, w2, b2 = raw_params
    D = wqkv.shape[0]
    head_dim = D // num_heads
    scale = 1.0 / math.sqrt(head_dim)

    col_scale = jnp.concatenate(
        [jnp.full((D,), scale, dtype=jnp.float32),
         jnp.ones((2 * D,), dtype=jnp.float32)])
    wqkv_s = (wqkv * col_scale[None, :]).astype(jnp.bfloat16)
    bqkv_s = (bqkv * col_scale).reshape(1, 3 * D).astype(jnp.float32)

    return (wqkv_s, bqkv_s,
            wp.astype(jnp.bfloat16), bp.reshape(1, D).astype(jnp.float32),
            w1.astype(jnp.bfloat16), b1.reshape(1, -1).astype(jnp.float32),
            w2.astype(jnp.bfloat16), b2.reshape(1, D).astype(jnp.float32))


def vit_block_forward(x, kernel_params, num_heads, eps=1e-6):
    """Fused pallas_call implementing ViTBlock.forward, grid over batch."""
    B, N, D = x.shape
    head_dim = D // num_heads
    wqkv, bqkv, wp, bp, w1, b1, w2, b2 = kernel_params
    H = w1.shape[1]

    kernel = functools.partial(_vit_block_kernel, num_heads=num_heads,
                               head_dim=head_dim, eps=eps)

    def resident(shape):  # full-extent block, constant index -> fetched once, stays in VMEM
        return pl.BlockSpec(shape, lambda b: (0, 0))

    grid_spec = pltpu.PrefetchScalarGridSpec(
        num_scalar_prefetch=0,
        grid=(B,),
        in_specs=[
            pl.BlockSpec((None, N, D), lambda b: (b, 0, 0)),      # x: one batch element/step
            resident((D, 3 * D)), resident((1, 3 * D)),           # wqkv, bqkv
            resident((D, D)),     resident((1, D)),               # wp, bp
            resident((D, H)),     resident((1, H)),               # w1, b1
            resident((H, D)),     resident((1, D)),               # w2, b2
        ],
        out_specs=pl.BlockSpec((None, N, D), lambda b: (b, 0, 0)),
        scratch_shapes=[pltpu.VMEM((N, D), jnp.bfloat16)],        # per-head output staging
    )

    out = pl.pallas_call(
        kernel,
        out_shape=jax.ShapeDtypeStruct((B, N, D), jnp.float32),
        grid_spec=grid_spec,
        compiler_params=pltpu.CompilerParams(
            dimension_semantics=("parallel",),          # batch split across TCs (v7x)
            vmem_limit_bytes=48 * 1024 * 1024),         # explicit, with v7x 64 MiB headroom
    )(x, *kernel_params)
    return out


# --------------------------- reference (plain JAX) --------------------------- #

def _ref_forward(x, raw_params, num_heads, eps=1e-6):
    wqkv, bqkv, wp, bp, w1, b1, w2, b2 = raw_params
    B, N, D = x.shape
    hd = D // num_heads

    def ln(t):
        mu = t.mean(-1, keepdims=True)
        var = ((t - mu) ** 2).mean(-1, keepdims=True)
        return (t - mu) / jnp.sqrt(var + eps)

    xn = ln(x)
    qkv = xn @ wqkv + bqkv
    q, k, v = qkv[..., :D], qkv[..., D:2 * D], qkv[..., 2 * D:]
    qh = q.reshape(B, N, num_heads, hd).transpose(0, 2, 1, 3)
    kh = k.reshape(B, N, num_heads, hd).transpose(0, 2, 1, 3)
    vh = v.reshape(B, N, num_heads, hd).transpose(0, 2, 1, 3)
    s = jnp.einsum('bhqd,bhkd->bhqk', qh, kh) / math.sqrt(hd)
    p = jax.nn.softmax(s, axis=-1)
    o = jnp.einsum('bhqk,bhkd->bhqd', p, vh).transpose(0, 2, 1, 3).reshape(B, N, D)
    x1 = x + o @ wp + bp

    xn2 = ln(x1)
    h = xn2 @ w1 + b1
    g = 0.5 * h * (1.0 + jnp.tanh(math.sqrt(2.0 / math.pi) * (h + 0.044715 * h ** 3)))
    return x1 + (g @ w2 + b2)


# ----------------------------------- main ------------------------------------ #

if __name__ == "__main__":
    # Small shapes consistent with the module.
    B, N = 2, 16                 # batch, sequence length (tokens)
    hidden_size = 32             # D
    num_heads = 4                # head_dim = 8
    mlp_ratio = 4.0
    mlp_hidden = int(hidden_size * mlp_ratio)   # 128 (lane-dense MLP hidden)

    key = jax.random.PRNGKey(0)
    keys = iter(jax.random.split(key, 16))

    def init(shape, scale=0.02):
        return (scale * jax.random.normal(next(keys), shape)).astype(jnp.float32)

    # Raw (PyTorch-like) parameters, stored as (in, out) so y = x @ W + b.
    wqkv = init((hidden_size, 3 * hidden_size))
    bqkv = init((3 * hidden_size,))
    wp = init((hidden_size, hidden_size))
    bp = init((hidden_size,))
    w1 = init((hidden_size, mlp_hidden))
    b1 = init((mlp_hidden,))
    w2 = init((mlp_hidden, hidden_size))
    b2 = init((hidden_size,))
    raw_params = (wqkv, bqkv, wp, bp, w1, b1, w2, b2)

    # One-time param transform (fold attention scale into fused qkv, cast weights to bf16).
    kparams = prepare_kernel_params(raw_params, num_heads)

    x = jax.random.normal(next(keys), (B, N, hidden_size), dtype=jnp.float32)

    out = vit_block_forward(x, kparams, num_heads)
    out = jax.block_until_ready(out)

    ref = _ref_forward(x, raw_params, num_heads)
    assert out.shape == (B, N, hidden_size)
    # Tolerance accounts for bf16 matmul operands (f32 accumulation) and the EUP
    # approximate reciprocal in the softmax denominator.
    max_diff = float(jnp.max(jnp.abs(out - ref)))
    assert jnp.allclose(out, ref, atol=1e-2, rtol=1e-2), (
        f"mismatch vs reference, max abs diff = {max_diff}")

    print("KERNEL_OK")
</pallas_src>

<mosaic_0001>
module attributes {stable_mosaic.version = 11 : i64} {
  func.func @_vit_block_kernel(%arg0: i32, %arg1: memref<1x16x32xf32, #tpu.memory_space<vmem>>, %arg2: memref<32x96xbf16, #tpu.memory_space<vmem>>, %arg3: memref<1x96xf32, #tpu.memory_space<vmem>>, %arg4: memref<32x32xbf16, #tpu.memory_space<vmem>>, %arg5: memref<1x32xf32, #tpu.memory_space<vmem>>, %arg6: memref<32x128xbf16, #tpu.memory_space<vmem>>, %arg7: memref<1x128xf32, #tpu.memory_space<vmem>>, %arg8: memref<128x32xbf16, #tpu.memory_space<vmem>>, %arg9: memref<1x32xf32, #tpu.memory_space<vmem>>, %arg10: memref<1x16x32xf32, #tpu.memory_space<vmem>>, %arg11: memref<16x32xbf16, #tpu.memory_space<vmem>>) attributes {dimension_semantics = [#tpu.dimension_semantics<parallel>], iteration_bounds = array<i64: 2>, scalar_prefetch = 0 : i64, scratch_operands = 1 : i64, tpu.core_type = #tpu.core_type<tc>, window_params = [{transform_indices = @transform_0, window_bounds = array<i64: 1, 16, 32>}, {pipeline_mode = #tpu.pipeline_mode<synchronous>, transform_indices = @transform_1, window_bounds = array<i64: 32, 96>}, {pipeline_mode = #tpu.pipeline_mode<synchronous>, transform_indices = @transform_2, window_bounds = array<i64: 1, 96>}, {pipeline_mode = #tpu.pipeline_mode<synchronous>, transform_indices = @transform_3, window_bounds = array<i64: 32, 32>}, {pipeline_mode = #tpu.pipeline_mode<synchronous>, transform_indices = @transform_4, window_bounds = array<i64: 1, 32>}, {pipeline_mode = #tpu.pipeline_mode<synchronous>, transform_indices = @transform_5, window_bounds = array<i64: 32, 128>}, {pipeline_mode = #tpu.pipeline_mode<synchronous>, transform_indices = @transform_6, window_bounds = array<i64: 1, 128>}, {pipeline_mode = #tpu.pipeline_mode<synchronous>, transform_indices = @transform_7, window_bounds = array<i64: 128, 32>}, {pipeline_mode = #tpu.pipeline_mode<synchronous>, transform_indices = @transform_8, window_bounds = array<i64: 1, 32>}, {transform_indices = @transform_9, window_bounds = array<i64: 1, 16, 32>}]} {
    %c0 = arith.constant 0 : index
    %c0_0 = arith.constant 0 : index
    %c0_1 = arith.constant 0 : index
    %0 = vector.load %arg1[%c0, %c0_0, %c0_1] : memref<1x16x32xf32, #tpu.memory_space<vmem>>, vector<1x16x32xf32>
    %1 = vector.shape_cast %0 : vector<1x16x32xf32> to vector<16x32xf32>
    %cst = arith.constant dense<0.000000e+00> : vector<16xf32>
    %2 = vector.multi_reduction <add>, %1, %cst [1] : vector<16x32xf32> to vector<16xf32>
    %3 = vector.shape_cast %2 : vector<16xf32> to vector<16x1xf32>
    %cst_2 = arith.constant 3.200000e+01 : f32
    %4 = vector.broadcast %cst_2 : f32 to vector<16x1xf32>
    %5 = arith.divf %3, %4 : vector<16x1xf32>
    %6 = vector.broadcast %5 : vector<16x1xf32> to vector<16x32xf32>
    %7 = arith.subf %1, %6 : vector<16x32xf32>
    %8 = arith.mulf %7, %7 : vector<16x32xf32>
    %cst_3 = arith.constant dense<0.000000e+00> : vector<16xf32>
    %9 = vector.multi_reduction <add>, %8, %cst_3 [1] : vector<16x32xf32> to vector<16xf32>
    %10 = vector.shape_cast %9 : vector<16xf32> to vector<16x1xf32>
    %cst_4 = arith.constant 3.200000e+01 : f32
    %11 = vector.broadcast %cst_4 : f32 to vector<16x1xf32>
    %12 = arith.divf %10, %11 : vector<16x1xf32>
    %cst_5 = arith.constant 9.99999997E-7 : f32
    %13 = vector.broadcast %cst_5 : f32 to vector<16x1xf32>
    %14 = arith.addf %12, %13 : vector<16x1xf32>
    %15 = math.rsqrt %14 : vector<16x1xf32>
    %16 = vector.broadcast %15 : vector<16x1xf32> to vector<16x32xf32>
    %17 = arith.mulf %7, %16 : vector<16x32xf32>
    %18 = arith.truncf %17 : vector<16x32xf32> to vector<16x32xbf16>
    %c0_6 = arith.constant 0 : index
    %c0_7 = arith.constant 0 : index
    %19 = vector.load %arg2[%c0_6, %c0_7] : memref<32x96xbf16, #tpu.memory_space<vmem>>, vector<32x96xbf16>
    %cst_8 = arith.constant dense<0.000000e+00> : vector<16x96xf32>
    %20 = tpu.matmul %18, %19, %cst_8 {dimension_numbers = #tpu.dot_dimension_numbers<[1], [0], [0], [1], [0, 0, 1, 1], [], []>} : vector<16x32xbf16>, vector<32x96xbf16>, vector<16x96xf32> -> vector<16x96xf32>
    %c0_9 = arith.constant 0 : index
    %c0_10 = arith.constant 0 : index
    %21 = vector.load %arg3[%c0_9, %c0_10] : memref<1x96xf32, #tpu.memory_space<vmem>>, vector<1x96xf32>
    %22 = vector.broadcast %21 : vector<1x96xf32> to vector<16x96xf32>
    %23 = arith.addf %20, %22 : vector<16x96xf32>
    %24 = arith.truncf %23 : vector<16x96xf32> to vector<16x96xbf16>
    %25 = vector.extract_strided_slice %24 {offsets = [0, 0], sizes = [16, 8], strides = [1, 1]} : vector<16x96xbf16> to vector<16x8xbf16>
    %26 = vector.extract_strided_slice %24 {offsets = [0, 32], sizes = [16, 8], strides = [1, 1]} : vector<16x96xbf16> to vector<16x8xbf16>
    %27 = vector.extract_strided_slice %24 {offsets = [0, 64], sizes = [16, 8], strides = [1, 1]} : vector<16x96xbf16> to vector<16x8xbf16>
    %cst_11 = arith.constant dense<0.000000e+00> : vector<16x16xf32>
    %28 = tpu.matmul %25, %26, %cst_11 {dimension_numbers = #tpu.dot_dimension_numbers<[1], [1], [0], [0], [0, 0, 1, 0], [], []>} : vector<16x8xbf16>, vector<16x8xbf16>, vector<16x16xf32> -> vector<16x16xf32>
    %cst_12 = arith.constant dense<0xFF800000> : vector<16xf32>
    %29 = vector.multi_reduction <maximumf>, %28, %cst_12 [1] : vector<16x16xf32> to vector<16xf32>
    %30 = vector.shape_cast %29 : vector<16xf32> to vector<16x1xf32>
    %31 = vector.broadcast %30 : vector<16x1xf32> to vector<16x16xf32>
    %32 = arith.subf %28, %31 : vector<16x16xf32>
    %33 = math.exp %32 : vector<16x16xf32>
    %cst_13 = arith.constant dense<0.000000e+00> : vector<16xf32>
    %34 = vector.multi_reduction <add>, %33, %cst_13 [1] : vector<16x16xf32> to vector<16xf32>
    %35 = vector.shape_cast %34 : vector<16xf32> to vector<16x1xf32>
    %36 = tpu.reciprocal %35 {approx = true} : vector<16x1xf32> -> vector<16x1xf32>
    %37 = vector.broadcast %36 : vector<16x1xf32> to vector<16x16xf32>
    %38 = arith.mulf %33, %37 : vector<16x16xf32>
    %39 = arith.truncf %38 : vector<16x16xf32> to vector<16x16xbf16>
    %cst_14 = arith.constant dense<0.000000e+00> : vector<16x8xf32>
    %40 = tpu.matmul %39, %27, %cst_14 {dimension_numbers = #tpu.dot_dimension_numbers<[1], [0], [0], [1], [0, 0, 1, 1], [], []>} : vector<16x16xbf16>, vector<16x8xbf16>, vector<16x8xf32> -> vector<16x8xf32>
    %41 = arith.truncf %40 : vector<16x8xf32> to vector<16x8xbf16>
    %c0_15 = arith.constant 0 : index
    %c0_16 = arith.constant 0 : index
    %42 = vector.load %arg11[%c0_15, %c0_16] : memref<16x32xbf16, #tpu.memory_space<vmem>>, vector<16x8xbf16>
    tpu.vector_store %arg11[%c0_15, %c0_16], %41 {strides = array<i32>} : memref<16x32xbf16, #tpu.memory_space<vmem>>, vector<16x8xbf16>,
    %43 = vector.extract_strided_slice %24 {offsets = [0, 8], sizes = [16, 8], strides = [1, 1]} : vector<16x96xbf16> to vector<16x8xbf16>
    %44 = vector.extract_strided_slice %24 {offsets = [0, 40], sizes = [16, 8], strides = [1, 1]} : vector<16x96xbf16> to vector<16x8xbf16>
    %45 = vector.extract_strided_slice %24 {offsets = [0, 72], sizes = [16, 8], strides = [1, 1]} : vector<16x96xbf16> to vector<16x8xbf16>
    %cst_17 = arith.constant dense<0.000000e+00> : vector<16x16xf32>
    %46 = tpu.matmul %43, %44, %cst_17 {dimension_numbers = #tpu.dot_dimension_numbers<[1], [1], [0], [0], [0, 0, 1, 0], [], []>} : vector<16x8xbf16>, vector<16x8xbf16>, vector<16x16xf32> -> vector<16x16xf32>
    %cst_18 = arith.constant dense<0xFF800000> : vector<16xf32>
    %47 = vector.multi_reduction <maximumf>, %46, %cst_18 [1] : vector<16x16xf32> to vector<16xf32>
    %48 = vector.shape_cast %47 : vector<16xf32> to vector<16x1xf32>
    %49 = vector.broadcast %48 : vector<16x1xf32> to vector<16x16xf32>
    %50 = arith.subf %46, %49 : vector<16x16xf32>
    %51 = math.exp %50 : vector<16x16xf32>
    %cst_19 = arith.constant dense<0.000000e+00> : vector<16xf32>
    %52 = vector.multi_reduction <add>, %51, %cst_19 [1] : vector<16x16xf32> to vector<16xf32>
    %53 = vector.shape_cast %52 : vector<16xf32> to vector<16x1xf32>
    %54 = tpu.reciprocal %53 {approx = true} : vector<16x1xf32> -> vector<16x1xf32>
    %55 = vector.broadcast %54 : vector<16x1xf32> to vector<16x16xf32>
    %56 = arith.mulf %51, %55 : vector<16x16xf32>
    %57 = arith.truncf %56 : vector<16x16xf32> to vector<16x16xbf16>
    %cst_20 = arith.constant dense<0.000000e+00> : vector<16x8xf32>
    %58 = tpu.matmul %57, %45, %cst_20 {dimension_numbers = #tpu.dot_dimension_numbers<[1], [0], [0], [1], [0, 0, 1, 1], [], []>} : vector<16x16xbf16>, vector<16x8xbf16>, vector<16x8xf32> -> vector<16x8xf32>
    %59 = arith.truncf %58 : vector<16x8xf32> to vector<16x8xbf16>
    %c0_21 = arith.constant 0 : index
    %c8 = arith.constant 8 : index
    %60 = vector.load %arg11[%c0_21, %c8] : memref<16x32xbf16, #tpu.memory_space<vmem>>, vector<16x8xbf16>
    tpu.vector_store %arg11[%c0_21, %c8], %59 {strides = array<i32>} : memref<16x32xbf16, #tpu.memory_space<vmem>>, vector<16x8xbf16>,
    %61 = vector.extract_strided_slice %24 {offsets = [0, 16], sizes = [16, 8], strides = [1, 1]} : vector<16x96xbf16> to vector<16x8xbf16>
    %62 = vector.extract_strided_slice %24 {offsets = [0, 48], sizes = [16, 8], strides = [1, 1]} : vector<16x96xbf16> to vector<16x8xbf16>
    %63 = vector.extract_strided_slice %24 {offsets = [0, 80], sizes = [16, 8], strides = [1, 1]} : vector<16x96xbf16> to vector<16x8xbf16>
    %cst_22 = arith.constant dense<0.000000e+00> : vector<16x16xf32>
    %64 = tpu.matmul %61, %62, %cst_22 {dimension_numbers = #tpu.dot_dimension_numbers<[1], [1], [0], [0], [0, 0, 1, 0], [], []>} : vector<16x8xbf16>, vector<16x8xbf16>, vector<16x16xf32> -> vector<16x16xf32>
    %cst_23 = arith.constant dense<0xFF800000> : vector<16xf32>
    %65 = vector.multi_reduction <maximumf>, %64, %cst_23 [1] : vector<16x16xf32> to vector<16xf32>
    %66 = vector.shape_cast %65 : vector<16xf32> to vector<16x1xf32>
    %67 = vector.broadcast %66 : vector<16x1xf32> to vector<16x16xf32>
    %68 = arith.subf %64, %67 : vector<16x16xf32>
    %69 = math.exp %68 : vector<16x16xf32>
    %cst_24 = arith.constant dense<0.000000e+00> : vector<16xf32>
    %70 = vector.multi_reduction <add>, %69, %cst_24 [1] : vector<16x16xf32> to vector<16xf32>
    %71 = vector.shape_cast %70 : vector<16xf32> to vector<16x1xf32>
    %72 = tpu.reciprocal %71 {approx = true} : vector<16x1xf32> -> vector<16x1xf32>
    %73 = vector.broadcast %72 : vector<16x1xf32> to vector<16x16xf32>
    %74 = arith.mulf %69, %73 : vector<16x16xf32>
    %75 = arith.truncf %74 : vector<16x16xf32> to vector<16x16xbf16>
    %cst_25 = arith.constant dense<0.000000e+00> : vector<16x8xf32>
    %76 = tpu.matmul %75, %63, %cst_25 {dimension_numbers = #tpu.dot_dimension_numbers<[1], [0], [0], [1], [0, 0, 1, 1], [], []>} : vector<16x16xbf16>, vector<16x8xbf16>, vector<16x8xf32> -> vector<16x8xf32>
    %77 = arith.truncf %76 : vector<16x8xf32> to vector<16x8xbf16>
    %c0_26 = arith.constant 0 : index
    %c16 = arith.constant 16 : index
    %78 = vector.load %arg11[%c0_26, %c16] : memref<16x32xbf16, #tpu.memory_space<vmem>>, vector<16x8xbf16>
    tpu.vector_store %arg11[%c0_26, %c16], %77 {strides = array<i32>} : memref<16x32xbf16, #tpu.memory_space<vmem>>, vector<16x8xbf16>,
    %79 = vector.extract_strided_slice %24 {offsets = [0, 24], sizes = [16, 8], strides = [1, 1]} : vector<16x96xbf16> to vector<16x8xbf16>
    %80 = vector.extract_strided_slice %24 {offsets = [0, 56], sizes = [16, 8], strides = [1, 1]} : vector<16x96xbf16> to vector<16x8xbf16>
    %81 = vector.extract_strided_slice %24 {offsets = [0, 88], sizes = [16, 8], strides = [1, 1]} : vector<16x96xbf16> to vector<16x8xbf16>
    %cst_27 = arith.constant dense<0.000000e+00> : vector<16x16xf32>
    %82 = tpu.matmul %79, %80, %cst_27 {dimension_numbers = #tpu.dot_dimension_numbers<[1], [1], [0], [0], [0, 0, 1, 0], [], []>} : vector<16x8xbf16>, vector<16x8xbf16>, vector<16x16xf32> -> vector<16x16xf32>
    %cst_28 = arith.constant dense<0xFF800000> : vector<16xf32>
    %83 = vector.multi_reduction <maximumf>, %82, %cst_28 [1] : vector<16x16xf32> to vector<16xf32>
    %84 = vector.shape_cast %83 : vector<16xf32> to vector<16x1xf32>
    %85 = vector.broadcast %84 : vector<16x1xf32> to vector<16x16xf32>
    %86 = arith.subf %82, %85 : vector<16x16xf32>
    %87 = math.exp %86 : vector<16x16xf32>
    %cst_29 = arith.constant dense<0.000000e+00> : vector<16xf32>
    %88 = vector.multi_reduction <add>, %87, %cst_29 [1] : vector<16x16xf32> to vector<16xf32>
    %89 = vector.shape_cast %88 : vector<16xf32> to vector<16x1xf32>
    %90 = tpu.reciprocal %89 {approx = true} : vector<16x1xf32> -> vector<16x1xf32>
    %91 = vector.broadcast %90 : vector<16x1xf32> to vector<16x16xf32>
    %92 = arith.mulf %87, %91 : vector<16x16xf32>
    %93 = arith.truncf %92 : vector<16x16xf32> to vector<16x16xbf16>
    %cst_30 = arith.constant dense<0.000000e+00> : vector<16x8xf32>
    %94 = tpu.matmul %93, %81, %cst_30 {dimension_numbers = #tpu.dot_dimension_numbers<[1], [0], [0], [1], [0, 0, 1, 1], [], []>} : vector<16x16xbf16>, vector<16x8xbf16>, vector<16x8xf32> -> vector<16x8xf32>
    %95 = arith.truncf %94 : vector<16x8xf32> to vector<16x8xbf16>
    %c0_31 = arith.constant 0 : index
    %c24 = arith.constant 24 : index
    %96 = vector.load %arg11[%c0_31, %c24] : memref<16x32xbf16, #tpu.memory_space<vmem>>, vector<16x8xbf16>
    tpu.vector_store %arg11[%c0_31, %c24], %95 {strides = array<i32>} : memref<16x32xbf16, #tpu.memory_space<vmem>>, vector<16x8xbf16>,
    %c0_32 = arith.constant 0 : index
    %c0_33 = arith.constant 0 : index
    %97 = vector.load %arg11[%c0_32, %c0_33] : memref<16x32xbf16, #tpu.memory_space<vmem>>, vector<16x32xbf16>
    %c0_34 = arith.constant 0 : index
    %c0_35 = arith.constant 0 : index
    %98 = vector.load %arg4[%c0_34, %c0_35] : memref<32x32xbf16, #tpu.memory_space<vmem>>, vector<32x32xbf16>
    %cst_36 = arith.constant dense<0.000000e+00> : vector<16x32xf32>
    %99 = tpu.matmul %97, %98, %cst_36 {dimension_numbers = #tpu.dot_dimension_numbers<[1], [0], [0], [1], [0, 0, 1, 1], [], []>} : vector<16x32xbf16>, vector<32x32xbf16>, vector<16x32xf32> -> vector<16x32xf32>
    %c0_37 = arith.constant 0 : index
    %c0_38 = arith.constant 0 : index
    %100 = vector.load %arg5[%c0_37, %c0_38] : memref<1x32xf32, #tpu.memory_space<vmem>>, vector<1x32xf32>
    %101 = vector.broadcast %100 : vector<1x32xf32> to vector<16x32xf32>
    %102 = arith.addf %99, %101 : vector<16x32xf32>
    %103 = arith.addf %1, %102 : vector<16x32xf32>
    %cst_39 = arith.constant dense<0.000000e+00> : vector<16xf32>
    %104 = vector.multi_reduction <add>, %103, %cst_39 [1] : vector<16x32xf32> to vector<16xf32>
    %105 = vector.shape_cast %104 : vector<16xf32> to vector<16x1xf32>
    %cst_40 = arith.constant 3.200000e+01 : f32
    %106 = vector.broadcast %cst_40 : f32 to vector<16x1xf32>
    %107 = arith.divf %105, %106 : vector<16x1xf32>
    %108 = vector.broadcast %107 : vector<16x1xf32> to vector<16x32xf32>
    %109 = arith.subf %103, %108 : vector<16x32xf32>
    %110 = arith.mulf %109, %109 : vector<16x32xf32>
    %cst_41 = arith.constant dense<0.000000e+00> : vector<16xf32>
    %111 = vector.multi_reduction <add>, %110, %cst_41 [1] : vector<16x32xf32> to vector<16xf32>
    %112 = vector.shape_cast %111 : vector<16xf32> to vector<16x1xf32>
    %cst_42 = arith.constant 3.200000e+01 : f32
    %113 = vector.broadcast %cst_42 : f32 to vector<16x1xf32>
    %114 = arith.divf %112, %113 : vector<16x1xf32>
    %cst_43 = arith.constant 9.99999997E-7 : f32
    %115 = vector.broadcast %cst_43 : f32 to vector<16x1xf32>
    %116 = arith.addf %114, %115 : vector<16x1xf32>
    %117 = math.rsqrt %116 : vector<16x1xf32>
    %118 = vector.broadcast %117 : vector<16x1xf32> to vector<16x32xf32>
    %119 = arith.mulf %109, %118 : vector<16x32xf32>
    %120 = arith.truncf %119 : vector<16x32xf32> to vector<16x32xbf16>
    %c0_44 = arith.constant 0 : index
    %c0_45 = arith.constant 0 : index
    %121 = vector.load %arg6[%c0_44, %c0_45] : memref<32x128xbf16, #tpu.memory_space<vmem>>, vector<32x128xbf16>
    %cst_46 = arith.constant dense<0.000000e+00> : vector<16x128xf32>
    %122 = tpu.matmul %120, %121, %cst_46 {dimension_numbers = #tpu.dot_dimension_numbers<[1], [0], [0], [1], [0, 0, 1, 1], [], []>} : vector<16x32xbf16>, vector<32x128xbf16>, vector<16x128xf32> -> vector<16x128xf32>
    %c0_47 = arith.constant 0 : index
    %c0_48 = arith.constant 0 : index
    %123 = vector.load %arg7[%c0_47, %c0_48] : memref<1x128xf32, #tpu.memory_space<vmem>>, vector<1x128xf32>
    %124 = vector.broadcast %123 : vector<1x128xf32> to vector<16x128xf32>
    %125 = arith.addf %122, %124 : vector<16x128xf32>
    %cst_49 = arith.constant 5.000000e-01 : f32
    %126 = vector.broadcast %cst_49 : f32 to vector<16x128xf32>
    %127 = arith.mulf %126, %125 : vector<16x128xf32>
    %cst_50 = arith.constant 4.471500e-02 : f32
    %128 = vector.broadcast %cst_50 : f32 to vector<16x128xf32>
    %129 = arith.mulf %128, %125 : vector<16x128xf32>
    %130 = arith.mulf %129, %125 : vector<16x128xf32>
    %131 = arith.mulf %130, %125 : vector<16x128xf32>
    %132 = arith.addf %125, %131 : vector<16x128xf32>
    %cst_51 = arith.constant 0.797884583 : f32
    %133 = vector.broadcast %cst_51 : f32 to vector<16x128xf32>
    %134 = arith.mulf %133, %132 : vector<16x128xf32>
    %135 = math.tanh %134 : vector<16x128xf32>
    %cst_52 = arith.constant 1.000000e+00 : f32
    %136 = vector.broadcast %cst_52 : f32 to vector<16x128xf32>
    %137 = arith.addf %136, %135 : vector<16x128xf32>
    %138 = arith.mulf %127, %137 : vector<16x128xf32>
    %139 = arith.truncf %138 : vector<16x128xf32> to vector<16x128xbf16>
    %c0_53 = arith.constant 0 : index
    %c0_54 = arith.constant 0 : index
    %140 = vector.load %arg8[%c0_53, %c0_54] : memref<128x32xbf16, #tpu.memory_space<vmem>>, vector<128x32xbf16>
    %cst_55 = arith.constant dense<0.000000e+00> : vector<16x32xf32>
    %141 = tpu.matmul %139, %140, %cst_55 {dimension_numbers = #tpu.dot_dimension_numbers<[1], [0], [0], [1], [0, 0, 1, 1], [], []>} : vector<16x128xbf16>, vector<128x32xbf16>, vector<16x32xf32> -> vector<16x32xf32>
    %c0_56 = arith.constant 0 : index
    %c0_57 = arith.constant 0 : index
    %142 = vector.load %arg9[%c0_56, %c0_57] : memref<1x32xf32, #tpu.memory_space<vmem>>, vector<1x32xf32>
    %143 = vector.broadcast %142 : vector<1x32xf32> to vector<16x32xf32>
    %144 = arith.addf %141, %143 : vector<16x32xf32>
    %145 = arith.addf %103, %144 : vector<16x32xf32>
    %c0_58 = arith.constant 0 : index
    %c0_59 = arith.constant 0 : index
    %c0_60 = arith.constant 0 : index
    %146 = vector.load %arg10[%c0_58, %c0_59, %c0_60] : memref<1x16x32xf32, #tpu.memory_space<vmem>>, vector<1x16x32xf32>
    %147 = vector.shape_cast %146 : vector<1x16x32xf32> to vector<16x32xf32>
    %148 = vector.shape_cast %145 : vector<16x32xf32> to vector<1x16x32xf32>
    tpu.vector_store %arg10[%c0_58, %c0_59, %c0_60], %148 {strides = array<i32>} : memref<1x16x32xf32, #tpu.memory_space<vmem>>, vector<1x16x32xf32>,
    return
  }
  func.func @transform_0(%arg0: i32) -> (i32, i32, i32) {
    %c0_i32 = arith.constant 0 : i32
    %c0_i32_0 = arith.constant 0 : i32
    %c0_i32_1 = arith.constant 0 : i32
    return %arg0, %c0_i32, %c0_i32_0 : i32, i32, i32
  }
  func.func @transform_1(%arg0: i32) -> (i32, i32) {
    %c0_i32 = arith.constant 0 : i32
    %c0_i32_0 = arith.constant 0 : i32
    %c0_i32_1 = arith.constant 0 : i32
    return %c0_i32, %c0_i32_0 : i32, i32
  }
  func.func @transform_2(%arg0: i32) -> (i32, i32) {
    %c0_i32 = arith.constant 0 : i32
    %c0_i32_0 = arith.constant 0 : i32
    %c0_i32_1 = arith.constant 0 : i32
    return %c0_i32, %c0_i32_0 : i32, i32
  }
  func.func @transform_3(%arg0: i32) -> (i32, i32) {
    %c0_i32 = arith.constant 0 : i32
    %c0_i32_0 = arith.constant 0 : i32
    %c0_i32_1 = arith.constant 0 : i32
    return %c0_i32, %c0_i32_0 : i32, i32
  }
  func.func @transform_4(%arg0: i32) -> (i32, i32) {
    %c0_i32 = arith.constant 0 : i32
    %c0_i32_0 = arith.constant 0 : i32
    %c0_i32_1 = arith.constant 0 : i32
    return %c0_i32, %c0_i32_0 : i32, i32
  }
  func.func @transform_5(%arg0: i32) -> (i32, i32) {
    %c0_i32 = arith.constant 0 : i32
    %c0_i32_0 = arith.constant 0 : i32
    %c0_i32_1 = arith.constant 0 : i32
    return %c0_i32, %c0_i32_0 : i32, i32
  }
  func.func @transform_6(%arg0: i32) -> (i32, i32) {
    %c0_i32 = arith.constant 0 : i32
    %c0_i32_0 = arith.constant 0 : i32
    %c0_i32_1 = arith.constant 0 : i32
    return %c0_i32, %c0_i32_0 : i32, i32
  }
  func.func @transform_7(%arg0: i32) -> (i32, i32) {
    %c0_i32 = arith.constant 0 : i32
    %c0_i32_0 = arith.constant 0 : i32
    %c0_i32_1 = arith.constant 0 : i32
    return %c0_i32, %c0_i32_0 : i32, i32
  }
  func.func @transform_8(%arg0: i32) -> (i32, i32) {
    %c0_i32 = arith.constant 0 : i32
    %c0_i32_0 = arith.constant 0 : i32
    %c0_i32_1 = arith.constant 0 : i32
    return %c0_i32, %c0_i32_0 : i32, i32
  }
  func.func @transform_9(%arg0: i32) -> (i32, i32, i32) {
    %c0_i32 = arith.constant 0 : i32
    %c0_i32_0 = arith.constant 0 : i32
    %c0_i32_1 = arith.constant 0 : i32
    return %arg0, %c0_i32, %c0_i32_0 : i32, i32, i32
  }
}

</mosaic_0001>

<llo_original>
// kernel: tpu_custom_call.1
$region0: #{tpu_custom_call.1}
  #allocation0 [shape = 'u32[]', space=smem, size = 0x4, offset = 0x4, fixed_abs, tag = 'smem constant byte address 0x4 - core index']
  #allocation1 [shape = 'u32[144,128]{1,0:T(1,128)}', space=vmem, size = 0x12000, scoped, tag = 'internal scratch']
  #allocation2 [shape = 'bf16[16,32]{1,0:T(16,128)(2,1)}', space=vmem, size = 0x1000, scoped, tag = 'scratch operand']
  %s0 = inlined_call_operand.vmem [shape: f32[2,16,32], index: 0, kind: input, shape index: {}]
  %s1 = inlined_call_operand.vmem [shape: bf16[32,96], index: 1, kind: input, shape index: {}]
  %s2 = inlined_call_operand.vmem [shape: f32[1,96], index: 2, kind: input, shape index: {}]
  %s3 = inlined_call_operand.vmem [shape: bf16[32,32], index: 3, kind: input, shape index: {}]
  %s4 = inlined_call_operand.vmem [shape: f32[1,32], index: 4, kind: input, shape index: {}]
  %s5 = inlined_call_operand.vmem [shape: bf16[32,128], index: 5, kind: input, shape index: {}]
  %s6 = inlined_call_operand.vmem [shape: f32[1,128], index: 6, kind: input, shape index: {}]
  %s7 = inlined_call_operand.vmem [shape: bf16[128,32], index: 7, kind: input, shape index: {}]
  %s8 = inlined_call_operand.vmem [shape: f32[1,32], index: 8, kind: input, shape index: {}]
  %s9 = inlined_call_operand.hbm [shape: f32[2,16,32], index: 9, kind: output, shape index: {}]
  %s10 = sld [smem:[#allocation0]]
  $region69: #{tpu_custom_call.1} parent=0
    _
  %s12 = ssub.s32 1, %s10
  %s13 = scalar_select 0, %s12, %s10
  $region1: #{tpu_custom_call.1} parent=0
    #allocation3 [shape = 'u8[16384]{0}', space=vmem, size = 0x4000, scoped, tag = 'output window, operand 0']
    #allocation4 [shape = 's32[2]{0}', space=sflag, size = 0x8, scoped, tag = 'scoped memory for tpu_custom_call.1']
    %14 = vsyncpa [#allocation4], 0
    %s15 = scalar_lea.sflag [#allocation4], 1
    %16 = vsyncpa %s15, 0
    loop: start=0, step=1, limit=4
    $region2: #{tpu_custom_call.1} parent=1 // loop_pre_header
      _
    $region3: #{tpu_custom_call.1} parent=1 // loop_header
      %s18 = sphi 0, %s22
      %p19 = scmp.ge.s32.totalorder %s18, 4
      %s28 = sphi 0, %s30
      %s31 = sphi 0, %s28
      %s32 = sphi 0, %s31
      %s48 = sphi 0, %s32
      %s52 = sphi 0, %s52
      %s54 = sphi 0, %s52
      %s55 = sphi 0, %s54
      %s69 = sphi 0, %s55
      %s73 = sphi 0, %s73
      %s75 = sphi 0, %s73
      %s76 = sphi 0, %s75
      %s90 = sphi 0, %s76
      %s94 = sphi 0, %s94
      %s96 = sphi 0, %s94
      %s97 = sphi 0, %s96
      %s111 = sphi 0, %s97
      %s115 = sphi 0, %s115
      %s117 = sphi 0, %s115
      %s118 = sphi 0, %s117
      %s132 = sphi 0, %s118
      %s136 = sphi 0, %s136
      %s138 = sphi 0, %s136
      %s139 = sphi 0, %s138
      %s153 = sphi 0, %s139
      %s157 = sphi 0, %s157
      %s159 = sphi 0, %s157
      %s160 = sphi 0, %s159
      %s174 = sphi 0, %s160
      %s178 = sphi 0, %s178
      %s180 = sphi 0, %s178
      %s181 = sphi 0, %s180
      %s195 = sphi 0, %s181
      %s199 = sphi 0, %s199
      %s201 = sphi 0, %s199
      %s202 = sphi 0, %s201
      %s216 = sphi 0, %s202
      %s222 = sphi 0, %s224
      %s225 = sphi 0, %s222
      %s226 = sphi 0, %s225
      %s242 = sphi 0, %s226
    $region4: #{tpu_custom_call.1} parent=1 // loop_header_branch
      %21 = sbr.rel (%p19) target = $region8
    $region5: #{tpu_custom_call.1} parent=1 // loop_body
      %s23 = ssub.s32 %s18, 1
      %s24 = ssub.s32 %s18, 2
      %s25 = sadd.s32 %s18, 1
      %s26 = ssub.s32 %s18, %s25
      %p27 = scmp.eq.s32.totalorder %s26, 0
      %s29 = sadd.s32 %s28, 1
      %s30 = scalar_select %p27, %s28, %s29
      %p33 = pneg %p27
      %p34 = scmp.eq.s32.totalorder %s18, 1
      %p35 = por %p33, %p34
      %p36 = scmp.ne.s32.totalorder %s28, %s31
      %p37 = scmp.eq.s32.totalorder %s18, 0
      %p38 = por %p36, %p37
      %p39 = scmp.ne.s32.totalorder %s28, %s31
      %p40 = scmp.eq.s32.totalorder %s23, 1
      %p41 = por %p39, %p40
      %p42 = scmp.ne.s32.totalorder %s31, %s32
      %p43 = scmp.eq.s32.totalorder %s23, 0
      %p44 = por %p42, %p43
      %p45 = scmp.ne.s32.totalorder %s31, %s32
      %p46 = scmp.eq.s32.totalorder %s24, 1
      %p47 = por %p45, %p46
      %p49 = scmp.ne.s32.totalorder %s32, %s48
      %p50 = scmp.eq.s32.totalorder %s24, 0
      %p51 = por %p49, %p50
      %s53 = sadd.s32 %s52, 1
      %p56 = scmp.eq.s32.totalorder %s18, 1
      %p57 = scmp.ne.s32.totalorder %s52, %s54
      %p58 = scmp.eq.s32.totalorder %s18, 0
      %p59 = por %p57, %p58
      %p60 = scmp.ne.s32.totalorder %s52, %s54
      %p61 = scmp.eq.s32.totalorder %s23, 1
      %p62 = por %p60, %p61
      %p63 = scmp.ne.s32.totalorder %s54, %s55
      %p64 = scmp.eq.s32.totalorder %s23, 0
      %p65 = por %p63, %p64
      %p66 = scmp.ne.s32.totalorder %s54, %s55
      %p67 = scmp.eq.s32.totalorder %s24, 1
      %p68 = por %p66, %p67
      %p70 = scmp.ne.s32.totalorder %s55, %s69
      %p71 = scmp.eq.s32.totalorder %s24, 0
      %p72 = por %p70, %p71
      %s74 = sadd.s32 %s73, 1
      %p77 = scmp.eq.s32.totalorder %s18, 1
      %p78 = scmp.ne.s32.totalorder %s73, %s75
      %p79 = scmp.eq.s32.totalorder %s18, 0
      %p80 = por %p78, %p79
      %p81 = scmp.ne.s32.totalorder %s73, %s75
      %p82 = scmp.eq.s32.totalorder %s23, 1
      %p83 = por %p81, %p82
      %p84 = scmp.ne.s32.totalorder %s75, %s76
      %p85 = scmp.eq.s32.totalorder %s23, 0
      %p86 = por %p84, %p85
      %p87 = scmp.ne.s32.totalorder %s75, %s76
      %p88 = scmp.eq.s32.totalorder %s24, 1
      %p89 = por %p87, %p88
      %p91 = scmp.ne.s32.totalorder %s76, %s90
      %p92 = scmp.eq.s32.totalorder %s24, 0
      %p93 = por %p91, %p92
      %s95 = sadd.s32 %s94, 1
      %p98 = scmp.eq.s32.totalorder %s18, 1
      %p99 = scmp.ne.s32.totalorder %s94, %s96
      %p100 = scmp.eq.s32.totalorder %s18, 0
      %p101 = por %p99, %p100
      %p102 = scmp.ne.s32.totalorder %s94, %s96
      %p103 = scmp.eq.s32.totalorder %s23, 1
      %p104 = por %p102, %p103
      %p105 = scmp.ne.s32.totalorder %s96, %s97
      %p106 = scmp.eq.s32.totalorder %s23, 0
      %p107 = por %p105, %p106
      %p108 = scmp.ne.s32.totalorder %s96, %s97
      %p109 = scmp.eq.s32.totalorder %s24, 1
      %p110 = por %p108, %p109
      %p112 = scmp.ne.s32.totalorder %s97, %s111
      %p113 = scmp.eq.s32.totalorder %s24, 0
      %p114 = por %p112, %p113
      %s116 = sadd.s32 %s115, 1
      %p119 = scmp.eq.s32.totalorder %s18, 1
      %p120 = scmp.ne.s32.totalorder %s115, %s117
      %p121 = scmp.eq.s32.totalorder %s18, 0
      %p122 = por %p120, %p121
      %p123 = scmp.ne.s32.totalorder %s115, %s117
      %p124 = scmp.eq.s32.totalorder %s23, 1
      %p125 = por %p123, %p124
      %p126 = scmp.ne.s32.totalorder %s117, %s118
      %p127 = scmp.eq.s32.totalorder %s23, 0
      %p128 = por %p126, %p127
      %p129 = scmp.ne.s32.totalorder %s117, %s118
      %p130 = scmp.eq.s32.totalorder %s24, 1
      %p131 = por %p129, %p130
      %p133 = scmp.ne.s32.totalorder %s118, %s132
      %p134 = scmp.eq.s32.totalorder %s24, 0
      %p135 = por %p133, %p134
      %s137 = sadd.s32 %s136, 1
      %p140 = scmp.eq.s32.totalorder %s18, 1
      %p141 = scmp.ne.s32.totalorder %s136, %s138
      %p142 = scmp.eq.s32.totalorder %s18, 0
      %p143 = por %p141, %p142
      %p144 = scmp.ne.s32.totalorder %s136, %s138
      %p145 = scmp.eq.s32.totalorder %s23, 1
      %p146 = por %p144, %p145
      %p147 = scmp.ne.s32.totalorder %s138, %s139
      %p148 = scmp.eq.s32.totalorder %s23, 0
      %p149 = por %p147, %p148
      %p150 = scmp.ne.s32.totalorder %s138, %s139
      %p151 = scmp.eq.s32.totalorder %s24, 1
      %p152 = por %p150, %p151
      %p154 = scmp.ne.s32.totalorder %s139, %s153
      %p155 = scmp.eq.s32.totalorder %s24, 0
      %p156 = por %p154, %p155
      %s158 = sadd.s32 %s157, 1
      %p161 = scmp.eq.s32.totalorder %s18, 1
      %p162 = scmp.ne.s32.totalorder %s157, %s159
      %p163 = scmp.eq.s32.totalorder %s18, 0
      %p164 = por %p162, %p163
      %p165 = scmp.ne.s32.totalorder %s157, %s159
      %p166 = scmp.eq.s32.totalorder %s23, 1
      %p167 = por %p165, %p166
      %p168 = scmp.ne.s32.totalorder %s159, %s160
      %p169 = scmp.eq.s32.totalorder %s23, 0
      %p170 = por %p168, %p169
      %p171 = scmp.ne.s32.totalorder %s159, %s160
      %p172 = scmp.eq.s32.totalorder %s24, 1
      %p173 = por %p171, %p172
      %p175 = scmp.ne.s32.totalorder %s160, %s174
      %p176 = scmp.eq.s32.totalorder %s24, 0
      %p177 = por %p175, %p176
      %s179 = sadd.s32 %s178, 1
      %p182 = scmp.eq.s32.totalorder %s18, 1
      %p183 = scmp.ne.s32.totalorder %s178, %s180
      %p184 = scmp.eq.s32.totalorder %s18, 0
      %p185 = por %p183, %p184
      %p186 = scmp.ne.s32.totalorder %s178, %s180
      %p187 = scmp.eq.s32.totalorder %s23, 1
      %p188 = por %p186, %p187
      %p189 = scmp.ne.s32.totalorder %s180, %s181
      %p190 = scmp.eq.s32.totalorder %s23, 0
      %p191 = por %p189, %p190
      %p192 = scmp.ne.s32.totalorder %s180, %s181
      %p193 = scmp.eq.s32.totalorder %s24, 1
      %p194 = por %p192, %p193
      %p196 = scmp.ne.s32.totalorder %s181, %s195
      %p197 = scmp.eq.s32.totalorder %s24, 0
      %p198 = por %p196, %p197
      %s200 = sadd.s32 %s199, 1
      %p203 = scmp.eq.s32.totalorder %s18, 1
      %p204 = scmp.ne.s32.totalorder %s199, %s201
      %p205 = scmp.eq.s32.totalorder %s18, 0
      %p206 = por %p204, %p205
      %p207 = scmp.ne.s32.totalorder %s199, %s201
      %p208 = scmp.eq.s32.totalorder %s23, 1
      %p209 = por %p207, %p208
      %p210 = scmp.ne.s32.totalorder %s201, %s202
      %p211 = scmp.eq.s32.totalorder %s23, 0
      %p212 = por %p210, %p211
      %p213 = scmp.ne.s32.totalorder %s201, %s202
      %p214 = scmp.eq.s32.totalorder %s24, 1
      %p215 = por %p213, %p214
      %p217 = scmp.ne.s32.totalorder %s202, %s216
      %p218 = scmp.eq.s32.totalorder %s24, 0
      %p219 = por %p217, %p218
      %s220 = ssub.s32 %s18, %s25
      %p221 = scmp.eq.s32.totalorder %s220, 0
      %s223 = sadd.s32 %s222, 1
      %s224 = scalar_select %p221, %s222, %s223
      %p227 = pneg %p221
      %p228 = scmp.eq.s32.totalorder %s18, 1
      %p229 = por %p227, %p228
      %p230 = scmp.ne.s32.totalorder %s222, %s225
      %p231 = scmp.eq.s32.totalorder %s18, 0
      %p232 = por %p230, %p231
      %p233 = scmp.ne.s32.totalorder %s222, %s225
      %p234 = scmp.eq.s32.totalorder %s23, 1
      %p235 = por %p233, %p234
      %p236 = scmp.ne.s32.totalorder %s225, %s226
      %p237 = scmp.eq.s32.totalorder %s23, 0
      %p238 = por %p236, %p237
      %p239 = scmp.ne.s32.totalorder %s225, %s226
      %p240 = scmp.eq.s32.totalorder %s24, 1
      %p241 = por %p239, %p240
      %p243 = scmp.ne.s32.totalorder %s226, %s242
      %p244 = scmp.eq.s32.totalorder %s24, 0
      %p245 = por %p243, %p244
      %p246 = scmp.le.s32.totalorder 1, %s18
      %p247 = scmp.lt.s32.totalorder %s18, 3
      %p248 = pnand %p246, %p247
      %p249 = pneg %p248
      // Predicated region
      $region9: #{tpu_custom_call.1} parent=5 // pred_check
        _
      $region10: #{tpu_custom_call.1} parent=5 // pred_check_branch
        %251 = sbr.rel (%p248) target = $region12
      $region11: #{tpu_custom_call.1} parent=5 // pred_region
        %s252 = ssub.s32 %s18, 1
        // Predicated region
        $region13: #{tpu_custom_call.1} parent=11 // pred_check
          %p253 = pneg %p65
        $region14: #{tpu_custom_call.1} parent=11 // pred_check_branch
          %255 = sbr.rel (%p253) target = $region16
        $region15: #{tpu_custom_call.1} parent=11 // pred_region
          _
        $region16: #{tpu_custom_call.1} parent=11 // pred_fallthru
          _
        // Predicated region
        $region17: #{tpu_custom_call.1} parent=11 // pred_check
          %p256 = pneg %p86
        $region18: #{tpu_custom_call.1} parent=11 // pred_check_branch
          %258 = sbr.rel (%p256) target = $region20
        $region19: #{tpu_custom_call.1} parent=11 // pred_region
          _
        $region20: #{tpu_custom_call.1} parent=11 // pred_fallthru
          _
        // Predicated region
        $region21: #{tpu_custom_call.1} parent=11 // pred_check
          %p259 = pneg %p107
        $region22: #{tpu_custom_call.1} parent=11 // pred_check_branch
          %261 = sbr.rel (%p259) target = $region24
        $region23: #{tpu_custom_call.1} parent=11 // pred_region
          _
        $region24: #{tpu_custom_call.1} parent=11 // pred_fallthru
          _
        // Predicated region
        $region25: #{tpu_custom_call.1} parent=11 // pred_check
          %p262 = pneg %p128
        $region26: #{tpu_custom_call.1} parent=11 // pred_check_branch
          %264 = sbr.rel (%p262) target = $region28
        $region27: #{tpu_custom_call.1} parent=11 // pred_region
          _
        $region28: #{tpu_custom_call.1} parent=11 // pred_fallthru
          _
        // Predicated region
        $region29: #{tpu_custom_call.1} parent=11 // pred_check
          %p265 = pneg %p149
        $region30: #{tpu_custom_call.1} parent=11 // pred_check_branch
          %267 = sbr.rel (%p265) target = $region32
        $region31: #{tpu_custom_call.1} parent=11 // pred_region
          _
        $region32: #{tpu_custom_call.1} parent=11 // pred_fallthru
          _
        // Predicated region
        $region33: #{tpu_custom_call.1} parent=11 // pred_check
          %p268 = pneg %p170
        $region34: #{tpu_custom_call.1} parent=11 // pred_check_branch
          %270 = sbr.rel (%p268) target = $region36
        $region35: #{tpu_custom_call.1} parent=11 // pred_region
          _
        $region36: #{tpu_custom_call.1} parent=11 // pred_fallthru
          _
        // Predicated region
        $region37: #{tpu_custom_call.1} parent=11 // pred_check
          %p271 = pneg %p191
        $region38: #{tpu_custom_call.1} parent=11 // pred_check_branch
          %273 = sbr.rel (%p271) target = $region40
        $region39: #{tpu_custom_call.1} parent=11 // pred_region
          _
        $region40: #{tpu_custom_call.1} parent=11 // pred_fallthru
          _
        // Predicated region
        $region41: #{tpu_custom_call.1} parent=11 // pred_check
          %p274 = pneg %p212
        $region42: #{tpu_custom_call.1} parent=11 // pred_check_branch
          %276 = sbr.rel (%p274) target = $region44
        $region43: #{tpu_custom_call.1} parent=11 // pred_region
          _
        $region44: #{tpu_custom_call.1} parent=11 // pred_fallthru
          _
      $region12: #{tpu_custom_call.1} parent=5 // pred_fallthru
        _
      %p277 = scmp.lt.s32.totalorder %s18, 2
      // Predicated region
      $region45: #{tpu_custom_call.1} parent=5 // pred_check
        %p278 = pneg %p277
      $region46: #{tpu_custom_call.1} parent=5 // pred_check_branch
        %280 = sbr.rel (%p278) target = $region48
      $region47: #{tpu_custom_call.1} parent=5 // pred_region
        // Predicated region
        $region49: #{tpu_custom_call.1} parent=47 // pred_check
          %p281 = pneg %p38
        $region50: #{tpu_custom_call.1} parent=47 // pred_check_branch
          %283 = sbr.rel (%p281) target = $region52
        $region51: #{tpu_custom_call.1} parent=47 // pred_region
          %p284 = scmp.lt.s32.totalorder %s18, 1
          %s285 = scalar_select %p284, %s18, 1
          %s286 = smul.addr %s285, 2
          %s287 = smul.addr %s286, 8
          %s288 = scalar_lea.vmem %s0, %s287
        $region52: #{tpu_custom_call.1} parent=47 // pred_fallthru
          _
      $region48: #{tpu_custom_call.1} parent=5 // pred_fallthru
        _
      %p289 = scmp.le.s32.totalorder 1, %s18
      %p290 = scmp.lt.s32.totalorder %s18, 3
      %p291 = pnand %p289, %p290
      %p292 = pneg %p291
      // Predicated region
      $region53: #{tpu_custom_call.1} parent=5 // pred_check
        _
      $region54: #{tpu_custom_call.1} parent=5 // pred_check_branch
        %294 = sbr.rel (%p291) target = $region56
      $region55: #{tpu_custom_call.1} parent=5 // pred_region
        %s295 = ssub.s32 %s18, 1
        %p296 = scmp.lt.s32.totalorder %s23, 1
        %s297 = scalar_select %p296, %s23, 1
        %s298 = smul.addr %s297, 2
        %s299 = smul.addr %s298, 8
        %s300 = scalar_lea.vmem %s0, %s299
        %p301 = pneg %p44
        %p302 = pneg %p41
        %p303 = pneg %p65
        %p304 = pneg %p62
        %p305 = pneg %p86
        %p306 = pneg %p83
        %p307 = pneg %p107
        %p308 = pneg %p104
        %p309 = pneg %p128
        %p310 = pneg %p125
        %p311 = pneg %p149
        %p312 = pneg %p146
        %p313 = pneg %p170
        %p314 = pneg %p167
        %p315 = pneg %p191
        %p316 = pneg %p188
        %p317 = pneg %p212
        %p318 = pneg %p209
        %p319 = pneg %p238
        %p320 = pneg %p235
        %s321 = sand.u32 %s225, 1
        %s322 = scalar_lea.sflag [#allocation4], %s321
        %s323 = sand.u32 %s225, 1
        %s324 = smul.addr %s323, 16
        %s325 = scalar_lea.vmem [#allocation3], %s324
        %p326 = scmp.lt.s32.totalorder %s23, 1
        %s327 = scalar_select %p326, %s23, 1
        %s328 = smul.addr %s327, 2
        %s329 = smul.addr %s328, 8
        %s330 = scalar_lea.vmem %s0, %s329
        %v332 = vld [vmem:[%s330] sm:$0xff]
        %v333 = vld [vmem:[%s330 + $0x8] sm:$0xff]
        %vm334 = vcmask 261120
        %v335 = vsel %vm334, %v332, 0.0
        %336 = vadd.xlane.f32.xlu0 %v335
        %v337 = vpop.xlane.xlu0 %336
        %v338 = vsel %vm334, %v333, 0.0
        %339 = vadd.xlane.f32.xlu0 %v338
        %v340 = vpop.xlane.xlu0 %339
        %v341 = vrcp.pop 32.0
        %v342 = vmul.f32 %v337, %v341
        %v343 = vmul.f32 %v340, %v341
        %v344 = vsub.f32 %v332, %v342
        %v345 = vsub.f32 %v333, %v343
        %v346 = vmul.f32 %v344, %v344
        %v347 = vmul.f32 %v345, %v345
        %v348 = vsel %vm334, %v346, 0.0
        %349 = vadd.xlane.f32.xlu0 %v348
        %v350 = vpop.xlane.xlu0 %349
        %v351 = vsel %vm334, %v347, 0.0
        %352 = vadd.xlane.f32.xlu0 %v351
        %v353 = vpop.xlane.xlu0 %352
        %v354 = vmul.f32 %v350, %v341
        %v355 = vmul.f32 %v353, %v341
        %v356 = vadd.f32 %v354, 1e-06
        %v357 = vadd.f32 %v355, 1e-06
        %v358 = vrsqrt.pop %v356
        %v359 = vrsqrt.pop %v357
        %v360 = vmul.f32 %v344, %v358
        %v361 = vmul.f32 %v345, %v359
        %v362 = vpack.c.bf16 %v361, %v360
        %v363 = vld [vmem:[%s1] sm:$0xf]
        %v364 = vld [vmem:[%s1 + $0x4] sm:$0xf]
        %v365 = vld [vmem:[%s1 + $0x8] sm:$0xf]
        %v366 = vld [vmem:[%s1 + $0xc] sm:$0xf]
        %v367 = vld [vmem:[%s2] sm:$0x1]
        %v369 = vlaneseq
        %v370 = vshrl.u32 %v369, 7
        %v371 = vsub.s32 0, %v370
        %v372 = vrot.slane %v367, %v371
        %v378 = vunpack.c.l.b16 %v363
        %v379 = vunpack.c.l.b16 %v364
        %v380 = vunpack.c.l.b16 %v365
        %v381 = vunpack.c.l.b16 %v366
        %v382 = vpack.c.b16 %v379, %v378
        %v383 = vpack.c.b16 %v381, %v380
        %v387 = vsel %vm334, %v362, 0
        %389 = vmatprep.subr.bf16.mxu0 0
        %390 = vmatpush1.bf16.msra.mxu0 %v382
        %391 = vmatprep.subr.bf16.mxu0 0
        %392 = vmatpush1.bf16.msra.mxu0 %v383
        %393 = vmatprep.subr.bf16.mxu0 0
        %394 = vmatpush1.bf16.msra.mxu0 0
        %395 = vmatprep.subr.bf16.mxu0 0
        %396 = vmatpush1.bf16.msra.mxu0 0
        %397 = vmatprep.subr.bf16.mxu0 0
        %398 = vmatpush1.bf16.msra.mxu0 0
        %399 = vmatprep.subr.bf16.mxu0 0
        %400 = vmatpush1.bf16.msra.mxu0 0
        %401 = vmatprep.subr.bf16.mxu0 0
        %402 = vmatpush1.bf16.msra.mxu0 0
        %403 = vmatprep.subr.bf16.mxu0 0
        %404 = vmatpush1.bf16.msra.mxu0 0
        %405 = vmatprep.subr.bf16.mxu0 0
        %406 = vmatpush1.bf16.msra.mxu0 0
        %407 = vmatprep.subr.bf16.mxu0 0
        %408 = vmatpush1.bf16.msra.mxu0 0
        %409 = vmatprep.subr.bf16.mxu0 0
        %410 = vmatpush1.bf16.msra.mxu0 0
        %411 = vmatprep.subr.bf16.mxu0 0
        %412 = vmatpush1.bf16.msra.mxu0 0
        %413 = vmatprep.subr.bf16.mxu0 0
        %414 = vmatpush1.bf16.msra.mxu0 0
        %415 = vmatprep.subr.bf16.mxu0 0
        %416 = vmatpush1.bf16.msra.mxu0 0
        %417 = vmatprep.subr.bf16.mxu0 0
        %418 = vmatpush1.bf16.msra.mxu0 0
        %419 = vmatprep.subr.bf16.mxu0 0
        %420 = vmatpush1.bf16.msra.mxu0 0
        %421 = vmatprep.mubr.bf16.mxu0 0
        %422 = vmatmul.mubr.bf16.gmra.mrb[0].mxu0 %v387
        %v423 = vpop.f32.mrb[0].mxu0
        %v424 = vadd.f32 %v372, %v423
        %v425 = vpop.f32.mrb[0].mxu0
        %v426 = vpop.f32.mrb[0].mxu0
        %v427 = vadd.f32 %v372, %v426
        %v428 = vpop.f32.mrb[0].mxu0
        %429 = vdwg.mxu0
        %v430 = vpack.c.bf16 %v427, %v424
        %432 = vrot.lane.b32.xlu0 %v430, 96
        %v433 = vpop.permute.xlu0 %432
        %vm434 = vcmask 64512
        %v436 = vsel %vm434, %v430, 0
        %v439 = vsel %vm434, %v433, 0
        %441 = vmatprep.subr.bf16.mxu0 0
        %442 = vmatpush1.bf16.xpose.msra.mxu0 %v439
        %443 = vmatprep.subr.bf16.mxu0 0
        %444 = vmatpush1.bf16.xpose.msra.mxu0 0
        %445 = vmatprep.subr.bf16.mxu0 0
        %446 = vmatpush1.bf16.xpose.msra.mxu0 0
        %447 = vmatprep.subr.bf16.mxu0 0
        %448 = vmatpush1.bf16.xpose.msra.mxu0 0
        %449 = vmatprep.subr.bf16.mxu0 0
        %450 = vmatpush1.bf16.xpose.msra.mxu0 0
        %451 = vmatprep.subr.bf16.mxu0 0
        %452 = vmatpush1.bf16.xpose.msra.mxu0 0
        %453 = vmatprep.subr.bf16.mxu0 0
        %454 = vmatpush1.bf16.xpose.msra.mxu0 0
        %455 = vmatprep.subr.bf16.mxu0 0
        %456 = vmatpush1.bf16.xpose.msra.mxu0 0
        %457 = vmatprep.subr.bf16.mxu0 0
        %458 = vmatpush1.bf16.xpose.msra.mxu0 0
        %459 = vmatprep.subr.bf16.mxu0 0
        %460 = vmatpush1.bf16.xpose.msra.mxu0 0
        %461 = vmatprep.subr.bf16.mxu0 0
        %462 = vmatpush1.bf16.xpose.msra.mxu0 0
        %463 = vmatprep.subr.bf16.mxu0 0
        %464 = vmatpush1.bf16.xpose.msra.mxu0 0
        %465 = vmatprep.subr.bf16.mxu0 0
        %466 = vmatpush1.bf16.xpose.msra.mxu0 0
        %467 = vmatprep.subr.bf16.mxu0 0
        %468 = vmatpush1.bf16.xpose.msra.mxu0 0
        %469 = vmatprep.subr.bf16.mxu0 0
        %470 = vmatpush1.bf16.xpose.msra.mxu0 0
        %471 = vmatprep.subr.bf16.mxu0 0
        %472 = vmatpush1.bf16.xpose.msra.mxu0 0
        %473 = vmatprep.mubr.bf16.mxu0 0
        %474 = vmatmul.mubr.bf16.gmra.mrb[0].mxu0 %v436
        %v475 = vpop.f32.mrb[0].mxu0
        %v476 = vadd.f32 0.0, %v475
        %v477 = vpop.f32.mrb[0].mxu0
        %v478 = vpop.f32.mrb[0].mxu0
        %v479 = vadd.f32 0.0, %v478
        %v480 = vpop.f32.mrb[0].mxu0
        %481 = vdwg.mxu0
        %vm482 = vcmask 130048
        %v483 = vsel %vm482, %v476, -inf
        %484 = vmax.xlane.f32.xlu0 %v483
        %v485 = vpop.xlane.xlu0 %484
        %v486 = vsel %vm482, %v479, -inf
        %487 = vmax.xlane.f32.xlu0 %v486
        %v488 = vpop.xlane.xlu0 %487
        %v489 = vsub.f32 %v476, %v485
        %v490 = vsub.f32 %v479, %v488
        %v491 = vmul.f32 %v489, 1.442695
        %v492 = vpow.pop %v491
        %v493 = vmul.f32 %v490, 1.442695
        %v494 = vpow.pop %v493
        %v495 = vsel %vm482, %v492, 0.0
        %496 = vadd.xlane.f32.xlu0 %v495
        %v497 = vpop.xlane.xlu0 %496
        %v498 = vsel %vm482, %v494, 0.0
        %499 = vadd.xlane.f32.xlu0 %v498
        %v500 = vpop.xlane.xlu0 %499
        %v501 = vrcp.pop %v497
        %v502 = vrcp.pop %v500
        %v503 = vmul.f32 %v492, %v501
        %v504 = vmul.f32 %v494, %v502
        %v505 = vpack.c.bf16 %v504, %v503
        %506 = vrot.lane.b32.xlu0 %v430, 64
        %v507 = vpop.permute.xlu0 %506
        %v510 = vsel %vm482, %v505, 0
        %512 = vmatprep.subr.bf16.mxu0 0
        %513 = vmatpush1.bf16.msra.mxu0 %v507
        %514 = vmatprep.subr.bf16.mxu0 0
        %515 = vmatpush1.bf16.msra.mxu0 0
        %516 = vmatprep.subr.bf16.mxu0 0
        %517 = vmatpush1.bf16.msra.mxu0 0
        %518 = vmatprep.subr.bf16.mxu0 0
        %519 = vmatpush1.bf16.msra.mxu0 0
        %520 = vmatprep.subr.bf16.mxu0 0
        %521 = vmatpush1.bf16.msra.mxu0 0
        %522 = vmatprep.subr.bf16.mxu0 0
        %523 = vmatpush1.bf16.msra.mxu0 0
        %524 = vmatprep.subr.bf16.mxu0 0
        %525 = vmatpush1.bf16.msra.mxu0 0
        %526 = vmatprep.subr.bf16.mxu0 0
        %527 = vmatpush1.bf16.msra.mxu0 0
        %528 = vmatprep.subr.bf16.mxu0 0
        %529 = vmatpush1.bf16.msra.mxu0 0
        %530 = vmatprep.subr.bf16.mxu0 0
        %531 = vmatpush1.bf16.msra.mxu0 0
        %532 = vmatprep.subr.bf16.mxu0 0
        %533 = vmatpush1.bf16.msra.mxu0 0
        %534 = vmatprep.subr.bf16.mxu0 0
        %535 = vmatpush1.bf16.msra.mxu0 0
        %536 = vmatprep.subr.bf16.mxu0 0
        %537 = vmatpush1.bf16.msra.mxu0 0
        %538 = vmatprep.subr.bf16.mxu0 0
        %539 = vmatpush1.bf16.msra.mxu0 0
        %540 = vmatprep.subr.bf16.mxu0 0
        %541 = vmatpush1.bf16.msra.mxu0 0
        %542 = vmatprep.subr.bf16.mxu0 0
        %543 = vmatpush1.bf16.msra.mxu0 0
        %544 = vmatprep.mubr.bf16.mxu0 0
        %545 = vmatmul.mubr.bf16.gmra.mrb[0].mxu0 %v510
        %v546 = vpop.f32.mrb[0].mxu0
        %v547 = vadd.f32 0.0, %v546
        %v548 = vpop.f32.mrb[0].mxu0
        %v549 = vpop.f32.mrb[0].mxu0
        %v550 = vadd.f32 0.0, %v549
        %v551 = vpop.f32.mrb[0].mxu0
        %552 = vdwg.mxu0
        %v553 = vpack.c.bf16 %v550, %v547
        %554 = vst.msk [vmem:[#allocation2] sm:$0xff] %vm434, %v553
        %555 = vrot.lane.b32.xlu0 %v430, 120
        %v556 = vpop.permute.xlu0 %555
        %557 = vrot.lane.b32.xlu0 %v430, 88
        %v558 = vpop.permute.xlu0 %557
        %v560 = vsel %vm434, %v556, 0
        %v563 = vsel %vm434, %v558, 0
        %565 = vmatprep.subr.bf16.mxu0 0
        %566 = vmatpush1.bf16.xpose.msra.mxu0 %v563
        %567 = vmatprep.subr.bf16.mxu0 0
        %568 = vmatpush1.bf16.xpose.msra.mxu0 0
        %569 = vmatprep.subr.bf16.mxu0 0
        %570 = vmatpush1.bf16.xpose.msra.mxu0 0
        %571 = vmatprep.subr.bf16.mxu0 0
        %572 = vmatpush1.bf16.xpose.msra.mxu0 0
        %573 = vmatprep.subr.bf16.mxu0 0
        %574 = vmatpush1.bf16.xpose.msra.mxu0 0
        %575 = vmatprep.subr.bf16.mxu0 0
        %576 = vmatpush1.bf16.xpose.msra.mxu0 0
        %577 = vmatprep.subr.bf16.mxu0 0
        %578 = vmatpush1.bf16.xpose.msra.mxu0 0
        %579 = vmatprep.subr.bf16.mxu0 0
        %580 = vmatpush1.bf16.xpose.msra.mxu0 0
        %581 = vmatprep.subr.bf16.mxu0 0
        %582 = vmatpush1.bf16.xpose.msra.mxu0 0
        %583 = vmatprep.subr.bf16.mxu0 0
        %584 = vmatpush1.bf16.xpose.msra.mxu0 0
        %585 = vmatprep.subr.bf16.mxu0 0
        %586 = vmatpush1.bf16.xpose.msra.mxu0 0
        %587 = vmatprep.subr.bf16.mxu0 0
        %588 = vmatpush1.bf16.xpose.msra.mxu0 0
        %589 = vmatprep.subr.bf16.mxu0 0
        %590 = vmatpush1.bf16.xpose.msra.mxu0 0
        %591 = vmatprep.subr.bf16.mxu0 0
        %592 = vmatpush1.bf16.xpose.msra.mxu0 0
        %593 = vmatprep.subr.bf16.mxu0 0
        %594 = vmatpush1.bf16.xpose.msra.mxu0 0
        %595 = vmatprep.subr.bf16.mxu0 0
        %596 = vmatpush1.bf16.xpose.msra.mxu0 0
        %597 = vmatprep.mubr.bf16.mxu0 0
        %598 = vmatmul.mubr.bf16.gmra.mrb[0].mxu0 %v560
        %v599 = vpop.f32.mrb[0].mxu0
        %v600 = vadd.f32 0.0, %v599
        %v601 = vpop.f32.mrb[0].mxu0
        %v602 = vpop.f32.mrb[0].mxu0
        %v603 = vadd.f32 0.0, %v602
        %v604 = vpop.f32.mrb[0].mxu0
        %605 = vdwg.mxu0
        %v606 = vsel %vm482, %v600, -inf
        %607 = vmax.xlane.f32.xlu0 %v606
        %v608 = vpop.xlane.xlu0 %607
        %v609 = vsel %vm482, %v603, -inf
        %610 = vmax.xlane.f32.xlu0 %v609
        %v611 = vpop.xlane.xlu0 %610
        %v612 = vsub.f32 %v600, %v608
        %v613 = vsub.f32 %v603, %v611
        %v614 = vmul.f32 %v612, 1.442695
        %v615 = vpow.pop %v614
        %v616 = vmul.f32 %v613, 1.442695
        %v617 = vpow.pop %v616
        %v618 = vsel %vm482, %v615, 0.0
        %619 = vadd.xlane.f32.xlu0 %v618
        %v620 = vpop.xlane.xlu0 %619
        %v621 = vsel %vm482, %v617, 0.0
        %622 = vadd.xlane.f32.xlu0 %v621
        %v623 = vpop.xlane.xlu0 %622
        %v624 = vrcp.pop %v620
        %v625 = vrcp.pop %v623
        %v626 = vmul.f32 %v615, %v624
        %v627 = vmul.f32 %v617, %v625
        %v628 = vpack.c.bf16 %v627, %v626
        %629 = vrot.lane.b32.xlu0 %v430, 56
        %v630 = vpop.permute.xlu0 %629
        %v633 = vsel %vm482, %v628, 0
        %635 = vmatprep.subr.bf16.mxu0 0
        %636 = vmatpush1.bf16.msra.mxu0 %v630
        %637 = vmatprep.subr.bf16.mxu0 0
        %638 = vmatpush1.bf16.msra.mxu0 0
        %639 = vmatprep.subr.bf16.mxu0 0
        %640 = vmatpush1.bf16.msra.mxu0 0
        %641 = vmatprep.subr.bf16.mxu0 0
        %642 = vmatpush1.bf16.msra.mxu0 0
        %643 = vmatprep.subr.bf16.mxu0 0
        %644 = vmatpush1.bf16.msra.mxu0 0
        %645 = vmatprep.subr.bf16.mxu0 0
        %646 = vmatpush1.bf16.msra.mxu0 0
        %647 = vmatprep.subr.bf16.mxu0 0
        %648 = vmatpush1.bf16.msra.mxu0 0
        %649 = vmatprep.subr.bf16.mxu0 0
        %650 = vmatpush1.bf16.msra.mxu0 0
        %651 = vmatprep.subr.bf16.mxu0 0
        %652 = vmatpush1.bf16.msra.mxu0 0
        %653 = vmatprep.subr.bf16.mxu0 0
        %654 = vmatpush1.bf16.msra.mxu0 0
        %655 = vmatprep.subr.bf16.mxu0 0
        %656 = vmatpush1.bf16.msra.mxu0 0
        %657 = vmatprep.subr.bf16.mxu0 0
        %658 = vmatpush1.bf16.msra.mxu0 0
        %659 = vmatprep.subr.bf16.mxu0 0
        %660 = vmatpush1.bf16.msra.mxu0 0
        %661 = vmatprep.subr.bf16.mxu0 0
        %662 = vmatpush1.bf16.msra.mxu0 0
        %663 = vmatprep.subr.bf16.mxu0 0
        %664 = vmatpush1.bf16.msra.mxu0 0
        %665 = vmatprep.subr.bf16.mxu0 0
        %666 = vmatpush1.bf16.msra.mxu0 0
        %667 = vmatprep.mubr.bf16.mxu0 0
        %668 = vmatmul.mubr.bf16.gmra.mrb[0].mxu0 %v633
        %v669 = vpop.f32.mrb[0].mxu0
        %v670 = vadd.f32 0.0, %v669
        %v671 = vpop.f32.mrb[0].mxu0
        %v672 = vpop.f32.mrb[0].mxu0
        %v673 = vadd.f32 0.0, %v672
        %v674 = vpop.f32.mrb[0].mxu0
        %675 = vdwg.mxu0
        %v676 = vpack.c.bf16 %v673, %v670
        %678 = vrot.lane.b32.xlu0 %v676, 8
        %v679 = vpop.permute.xlu0 %678
        %vm681 = vcmask 130112
        %682 = vst.msk [vmem:[#allocation2] sm:$0xff] %vm681, %v679
        %683 = vrot.lane.b32.xlu0 %v430, 112
        %v684 = vpop.permute.xlu0 %683
        %685 = vrot.lane.b32.xlu0 %v430, 80
        %v686 = vpop.permute.xlu0 %685
        %v688 = vsel %vm434, %v684, 0
        %v691 = vsel %vm434, %v686, 0
        %693 = vmatprep.subr.bf16.mxu0 0
        %694 = vmatpush1.bf16.xpose.msra.mxu0 %v691
        %695 = vmatprep.subr.bf16.mxu0 0
        %696 = vmatpush1.bf16.xpose.msra.mxu0 0
        %697 = vmatprep.subr.bf16.mxu0 0
        %698 = vmatpush1.bf16.xpose.msra.mxu0 0
        %699 = vmatprep.subr.bf16.mxu0 0
        %700 = vmatpush1.bf16.xpose.msra.mxu0 0
        %701 = vmatprep.subr.bf16.mxu0 0
        %702 = vmatpush1.bf16.xpose.msra.mxu0 0
        %703 = vmatprep.subr.bf16.mxu0 0
        %704 = vmatpush1.bf16.xpose.msra.mxu0 0
        %705 = vmatprep.subr.bf16.mxu0 0
        %706 = vmatpush1.bf16.xpose.msra.mxu0 0
        %707 = vmatprep.subr.bf16.mxu0 0
        %708 = vmatpush1.bf16.xpose.msra.mxu0 0
        %709 = vmatprep.subr.bf16.mxu0 0
        %710 = vmatpush1.bf16.xpose.msra.mxu0 0
        %711 = vmatprep.subr.bf16.mxu0 0
        %712 = vmatpush1.bf16.xpose.msra.mxu0 0
        %713 = vmatprep.subr.bf16.mxu0 0
        %714 = vmatpush1.bf16.xpose.msra.mxu0 0
        %715 = vmatprep.subr.bf16.mxu0 0
        %716 = vmatpush1.bf16.xpose.msra.mxu0 0
        %717 = vmatprep.subr.bf16.mxu0 0
        %718 = vmatpush1.bf16.xpose.msra.mxu0 0
        %719 = vmatprep.subr.bf16.mxu0 0
        %720 = vmatpush1.bf16.xpose.msra.mxu0 0
        %721 = vmatprep.subr.bf16.mxu0 0
        %722 = vmatpush1.bf16.xpose.msra.mxu0 0
        %723 = vmatprep.subr.bf16.mxu0 0
        %724 = vmatpush1.bf16.xpose.msra.mxu0 0
        %725 = vmatprep.mubr.bf16.mxu0 0
        %726 = vmatmul.mubr.bf16.gmra.mrb[0].mxu0 %v688
        %v727 = vpop.f32.mrb[0].mxu0
        %v728 = vadd.f32 0.0, %v727
        %v729 = vpop.f32.mrb[0].mxu0
        %v730 = vpop.f32.mrb[0].mxu0
        %v731 = vadd.f32 0.0, %v730
        %v732 = vpop.f32.mrb[0].mxu0
        %733 = vdwg.mxu0
        %v734 = vsel %vm482, %v728, -inf
        %735 = vmax.xlane.f32.xlu0 %v734
        %v736 = vpop.xlane.xlu0 %735
        %v737 = vsel %vm482, %v731, -inf
        %738 = vmax.xlane.f32.xlu0 %v737
        %v739 = vpop.xlane.xlu0 %738
        %v740 = vsub.f32 %v728, %v736
        %v741 = vsub.f32 %v731, %v739
        %v742 = vmul.f32 %v740, 1.442695
        %v743 = vpow.pop %v742
        %v744 = vmul.f32 %v741, 1.442695
        %v745 = vpow.pop %v744
        %v746 = vsel %vm482, %v743, 0.0
        %747 = vadd.xlane.f32.xlu0 %v746
        %v748 = vpop.xlane.xlu0 %747
        %v749 = vsel %vm482, %v745, 0.0
        %750 = vadd.xlane.f32.xlu0 %v749
        %v751 = vpop.xlane.xlu0 %750
        %v752 = vrcp.pop %v748
        %v753 = vrcp.pop %v751
        %v754 = vmul.f32 %v743, %v752
        %v755 = vmul.f32 %v745, %v753
        %v756 = vpack.c.bf16 %v755, %v754
        %757 = vrot.lane.b32.xlu0 %v430, 48
        %v758 = vpop.permute.xlu0 %757
        %v761 = vsel %vm482, %v756, 0
        %763 = vmatprep.subr.bf16.mxu0 0
        %764 = vmatpush1.bf16.msra.mxu0 %v758
        %765 = vmatprep.subr.bf16.mxu0 0
        %766 = vmatpush1.bf16.msra.mxu0 0
        %767 = vmatprep.subr.bf16.mxu0 0
        %768 = vmatpush1.bf16.msra.mxu0 0
        %769 = vmatprep.subr.bf16.mxu0 0
        %770 = vmatpush1.bf16.msra.mxu0 0
        %771 = vmatprep.subr.bf16.mxu0 0
        %772 = vmatpush1.bf16.msra.mxu0 0
        %773 = vmatprep.subr.bf16.mxu0 0
        %774 = vmatpush1.bf16.msra.mxu0 0
        %775 = vmatprep.subr.bf16.mxu0 0
        %776 = vmatpush1.bf16.msra.mxu0 0
        %777 = vmatprep.subr.bf16.mxu0 0
        %778 = vmatpush1.bf16.msra.mxu0 0
        %779 = vmatprep.subr.bf16.mxu0 0
        %780 = vmatpush1.bf16.msra.mxu0 0
        %781 = vmatprep.subr.bf16.mxu0 0
        %782 = vmatpush1.bf16.msra.mxu0 0
        %783 = vmatprep.subr.bf16.mxu0 0
        %784 = vmatpush1.bf16.msra.mxu0 0
        %785 = vmatprep.subr.bf16.mxu0 0
        %786 = vmatpush1.bf16.msra.mxu0 0
        %787 = vmatprep.subr.bf16.mxu0 0
        %788 = vmatpush1.bf16.msra.mxu0 0
        %789 = vmatprep.subr.bf16.mxu0 0
        %790 = vmatpush1.bf16.msra.mxu0 0
        %791 = vmatprep.subr.bf16.mxu0 0
        %792 = vmatpush1.bf16.msra.mxu0 0
        %793 = vmatprep.subr.bf16.mxu0 0
        %794 = vmatpush1.bf16.msra.mxu0 0
        %795 = vmatprep.mubr.bf16.mxu0 0
        %796 = vmatmul.mubr.bf16.gmra.mrb[0].mxu0 %v761
        %v797 = vpop.f32.mrb[0].mxu0
        %v798 = vadd.f32 0.0, %v797
        %v799 = vpop.f32.mrb[0].mxu0
        %v800 = vpop.f32.mrb[0].mxu0
        %v801 = vadd.f32 0.0, %v800
        %v802 = vpop.f32.mrb[0].mxu0
        %803 = vdwg.mxu0
        %v804 = vpack.c.bf16 %v801, %v798
        %806 = vrot.lane.b32.xlu0 %v804, 16
        %v807 = vpop.permute.xlu0 %806
        %vm809 = vcmask 195712
        %810 = vst.msk [vmem:[#allocation2] sm:$0xff] %vm809, %v807
        %811 = vrot.lane.b32.xlu0 %v430, 104
        %v812 = vpop.permute.xlu0 %811
        %813 = vrot.lane.b32.xlu0 %v430, 72
        %v814 = vpop.permute.xlu0 %813
        %v816 = vsel %vm434, %v812, 0
        %v819 = vsel %vm434, %v814, 0
        %821 = vmatprep.subr.bf16.mxu0 0
        %822 = vmatpush1.bf16.xpose.msra.mxu0 %v819
        %823 = vmatprep.subr.bf16.mxu0 0
        %824 = vmatpush1.bf16.xpose.msra.mxu0 0
        %825 = vmatprep.subr.bf16.mxu0 0
        %826 = vmatpush1.bf16.xpose.msra.mxu0 0
        %827 = vmatprep.subr.bf16.mxu0 0
        %828 = vmatpush1.bf16.xpose.msra.mxu0 0
        %829 = vmatprep.subr.bf16.mxu0 0
        %830 = vmatpush1.bf16.xpose.msra.mxu0 0
        %831 = vmatprep.subr.bf16.mxu0 0
        %832 = vmatpush1.bf16.xpose.msra.mxu0 0
        %833 = vmatprep.subr.bf16.mxu0 0
        %834 = vmatpush1.bf16.xpose.msra.mxu0 0
        %835 = vmatprep.subr.bf16.mxu0 0
        %836 = vmatpush1.bf16.xpose.msra.mxu0 0
        %837 = vmatprep.subr.bf16.mxu0 0
        %838 = vmatpush1.bf16.xpose.msra.mxu0 0
        %839 = vmatprep.subr.bf16.mxu0 0
        %840 = vmatpush1.bf16.xpose.msra.mxu0 0
        %841 = vmatprep.subr.bf16.mxu0 0
        %842 = vmatpush1.bf16.xpose.msra.mxu0 0
        %843 = vmatprep.subr.bf16.mxu0 0
        %844 = vmatpush1.bf16.xpose.msra.mxu0 0
        %845 = vmatprep.subr.bf16.mxu0 0
        %846 = vmatpush1.bf16.xpose.msra.mxu0 0
        %847 = vmatprep.subr.bf16.mxu0 0
        %848 = vmatpush1.bf16.xpose.msra.mxu0 0
        %849 = vmatprep.subr.bf16.mxu0 0
        %850 = vmatpush1.bf16.xpose.msra.mxu0 0
        %851 = vmatprep.subr.bf16.mxu0 0
        %852 = vmatpush1.bf16.xpose.msra.mxu0 0
        %853 = vmatprep.mubr.bf16.mxu0 0
        %854 = vmatmul.mubr.bf16.gmra.mrb[0].mxu0 %v816
        %v855 = vpop.f32.mrb[0].mxu0
        %v856 = vadd.f32 0.0, %v855
        %v857 = vpop.f32.mrb[0].mxu0
        %v858 = vpop.f32.mrb[0].mxu0
        %v859 = vadd.f32 0.0, %v858
        %v860 = vpop.f32.mrb[0].mxu0
        %861 = vdwg.mxu0
        %v862 = vsel %vm482, %v856, -inf
        %863 = vmax.xlane.f32.xlu0 %v862
        %v864 = vpop.xlane.xlu0 %863
        %v865 = vsel %vm482, %v859, -inf
        %866 = vmax.xlane.f32.xlu0 %v865
        %v867 = vpop.xlane.xlu0 %866
        %v868 = vsub.f32 %v856, %v864
        %v869 = vsub.f32 %v859, %v867
        %v870 = vmul.f32 %v868, 1.442695
        %v871 = vpow.pop %v870
        %v872 = vmul.f32 %v869, 1.442695
        %v873 = vpow.pop %v872
        %v874 = vsel %vm482, %v871, 0.0
        %875 = vadd.xlane.f32.xlu0 %v874
        %v876 = vpop.xlane.xlu0 %875
        %v877 = vsel %vm482, %v873, 0.0
        %878 = vadd.xlane.f32.xlu0 %v877
        %v879 = vpop.xlane.xlu0 %878
        %v880 = vrcp.pop %v876
        %v881 = vrcp.pop %v879
        %v882 = vmul.f32 %v871, %v880
        %v883 = vmul.f32 %v873, %v881
        %v884 = vpack.c.bf16 %v883, %v882
        %885 = vrot.lane.b32.xlu0 %v430, 40
        %v886 = vpop.permute.xlu0 %885
        %v889 = vsel %vm482, %v884, 0
        %891 = vmatprep.subr.bf16.mxu0 0
        %892 = vmatpush1.bf16.msra.mxu0 %v886
        %893 = vmatprep.subr.bf16.mxu0 0
        %894 = vmatpush1.bf16.msra.mxu0 0
        %895 = vmatprep.subr.bf16.mxu0 0
        %896 = vmatpush1.bf16.msra.mxu0 0
        %897 = vmatprep.subr.bf16.mxu0 0
        %898 = vmatpush1.bf16.msra.mxu0 0
        %899 = vmatprep.subr.bf16.mxu0 0
        %900 = vmatpush1.bf16.msra.mxu0 0
        %901 = vmatprep.subr.bf16.mxu0 0
        %902 = vmatpush1.bf16.msra.mxu0 0
        %903 = vmatprep.subr.bf16.mxu0 0
        %904 = vmatpush1.bf16.msra.mxu0 0
        %905 = vmatprep.subr.bf16.mxu0 0
        %906 = vmatpush1.bf16.msra.mxu0 0
        %907 = vmatprep.subr.bf16.mxu0 0
        %908 = vmatpush1.bf16.msra.mxu0 0
        %909 = vmatprep.subr.bf16.mxu0 0
        %910 = vmatpush1.bf16.msra.mxu0 0
        %911 = vmatprep.subr.bf16.mxu0 0
        %912 = vmatpush1.bf16.msra.mxu0 0
        %913 = vmatprep.subr.bf16.mxu0 0
        %914 = vmatpush1.bf16.msra.mxu0 0
        %915 = vmatprep.subr.bf16.mxu0 0
        %916 = vmatpush1.bf16.msra.mxu0 0
        %917 = vmatprep.subr.bf16.mxu0 0
        %918 = vmatpush1.bf16.msra.mxu0 0
        %919 = vmatprep.subr.bf16.mxu0 0
        %920 = vmatpush1.bf16.msra.mxu0 0
        %921 = vmatprep.subr.bf16.mxu0 0
        %922 = vmatpush1.bf16.msra.mxu0 0
        %923 = vmatprep.mubr.bf16.mxu0 0
        %924 = vmatmul.mubr.bf16.gmra.mrb[0].mxu0 %v889
        %v925 = vpop.f32.mrb[0].mxu0
        %v926 = vadd.f32 0.0, %v925
        %v927 = vpop.f32.mrb[0].mxu0
        %v928 = vpop.f32.mrb[0].mxu0
        %v929 = vadd.f32 0.0, %v928
        %v930 = vpop.f32.mrb[0].mxu0
        %931 = vdwg.mxu0
        %v932 = vpack.c.bf16 %v929, %v926
        %934 = vrot.lane.b32.xlu0 %v932, 24
        %v935 = vpop.permute.xlu0 %934
        %vm937 = vcmask 261312
        %938 = vst.msk [vmem:[#allocation2] sm:$0xff] %vm937, %v935
        %v939 = vld [vmem:[#allocation2] sm:$0xff]
        %v940 = vld [vmem:[%s3] sm:$0xf]
        %v941 = vld [vmem:[%s3 + $0x4] sm:$0xf]
        %v942 = vld [vmem:[%s3 + $0x8] sm:$0xf]
        %v943 = vld [vmem:[%s3 + $0xc] sm:$0xf]
        %v944 = vld [vmem:[%s4] sm:$0x1]
        %v946 = vlaneseq
        %v947 = vshrl.u32 %v946, 7
        %v948 = vsub.s32 0, %v947
        %v949 = vrot.slane %v944, %v948
        %v955 = vunpack.c.l.b16 %v940
        %v956 = vunpack.c.l.b16 %v941
        %v957 = vunpack.c.l.b16 %v942
        %v958 = vunpack.c.l.b16 %v943
        %v959 = vpack.c.b16 %v956, %v955
        %v960 = vpack.c.b16 %v958, %v957
        %v964 = vsel %vm334, %v939, 0
        %966 = vmatprep.subr.bf16.mxu0 0
        %967 = vmatpush1.bf16.msra.mxu0 %v959
        %968 = vmatprep.subr.bf16.mxu0 0
        %969 = vmatpush1.bf16.msra.mxu0 %v960
        %970 = vmatprep.subr.bf16.mxu0 0
        %971 = vmatpush1.bf16.msra.mxu0 0
        %972 = vmatprep.subr.bf16.mxu0 0
        %973 = vmatpush1.bf16.msra.mxu0 0
        %974 = vmatprep.subr.bf16.mxu0 0
        %975 = vmatpush1.bf16.msra.mxu0 0
        %976 = vmatprep.subr.bf16.mxu0 0
        %977 = vmatpush1.bf16.msra.mxu0 0
        %978 = vmatprep.subr.bf16.mxu0 0
        %979 = vmatpush1.bf16.msra.mxu0 0
        %980 = vmatprep.subr.bf16.mxu0 0
        %981 = vmatpush1.bf16.msra.mxu0 0
        %982 = vmatprep.subr.bf16.mxu0 0
        %983 = vmatpush1.bf16.msra.mxu0 0
        %984 = vmatprep.subr.bf16.mxu0 0
        %985 = vmatpush1.bf16.msra.mxu0 0
        %986 = vmatprep.subr.bf16.mxu0 0
        %987 = vmatpush1.bf16.msra.mxu0 0
        %988 = vmatprep.subr.bf16.mxu0 0
        %989 = vmatpush1.bf16.msra.mxu0 0
        %990 = vmatprep.subr.bf16.mxu0 0
        %991 = vmatpush1.bf16.msra.mxu0 0
        %992 = vmatprep.subr.bf16.mxu0 0
        %993 = vmatpush1.bf16.msra.mxu0 0
        %994 = vmatprep.subr.bf16.mxu0 0
        %995 = vmatpush1.bf16.msra.mxu0 0
        %996 = vmatprep.subr.bf16.mxu0 0
        %997 = vmatpush1.bf16.msra.mxu0 0
        %998 = vmatprep.mubr.bf16.mxu0 0
        %999 = vmatmul.mubr.bf16.gmra.mrb[0].mxu0 %v964
        %v1000 = vpop.f32.mrb[0].mxu0
        %v1001 = vadd.f32 %v949, %v1000
        %v1002 = vpop.f32.mrb[0].mxu0
        %v1003 = vpop.f32.mrb[0].mxu0
        %v1004 = vadd.f32 %v949, %v1003
        %v1005 = vpop.f32.mrb[0].mxu0
        %1006 = vdwg.mxu0
        %v1007 = vadd.f32 %v332, %v1001
        %v1008 = vadd.f32 %v333, %v1004
        %v1009 = vsel %vm334, %v1007, 0.0
        %1010 = vadd.xlane.f32.xlu0 %v1009
        %v1011 = vpop.xlane.xlu0 %1010
        %v1012 = vsel %vm334, %v1008, 0.0
        %1013 = vadd.xlane.f32.xlu0 %v1012
        %v1014 = vpop.xlane.xlu0 %1013
        %v1015 = vmul.f32 %v1011, %v341
        %v1016 = vmul.f32 %v1014, %v341
        %v1017 = vsub.f32 %v1007, %v1015
        %v1018 = vsub.f32 %v1008, %v1016
        %v1019 = vmul.f32 %v1017, %v1017
        %v1020 = vmul.f32 %v1018, %v1018
        %v1021 = vsel %vm334, %v1019, 0.0
        %1022 = vadd.xlane.f32.xlu0 %v1021
        %v1023 = vpop.xlane.xlu0 %1022
        %v1024 = vsel %vm334, %v1020, 0.0
        %1025 = vadd.xlane.f32.xlu0 %v1024
        %v1026 = vpop.xlane.xlu0 %1025
        %v1027 = vmul.f32 %v1023, %v341
        %v1028 = vmul.f32 %v1026, %v341
        %v1029 = vadd.f32 %v1027, 1e-06
        %v1030 = vadd.f32 %v1028, 1e-06
        %v1031 = vrsqrt.pop %v1029
        %v1032 = vrsqrt.pop %v1030
        %v1033 = vmul.f32 %v1017, %v1031
        %v1034 = vmul.f32 %v1018, %v1032
        %v1035 = vpack.c.bf16 %v1034, %v1033
        %v1036 = vld [vmem:[%s5] sm:$0xf]
        %v1037 = vld [vmem:[%s5 + $0x4] sm:$0xf]
        %v1038 = vld [vmem:[%s5 + $0x8] sm:$0xf]
        %v1039 = vld [vmem:[%s5 + $0xc] sm:$0xf]
        %v1040 = vld [vmem:[%s6] sm:$0x1]
        %v1042 = vlaneseq
        %v1043 = vshrl.u32 %v1042, 7
        %v1044 = vsub.s32 0, %v1043
        %v1045 = vrot.slane %v1040, %v1044
        %v1051 = vunpack.c.l.b16 %v1036
        %v1052 = vunpack.c.l.b16 %v1037
        %v1053 = vunpack.c.l.b16 %v1038
        %v1054 = vunpack.c.l.b16 %v1039
        %v1055 = vpack.c.b16 %v1052, %v1051
        %v1056 = vpack.c.b16 %v1054, %v1053
        %v1060 = vsel %vm334, %v1035, 0
        %1062 = vmatprep.subr.bf16.mxu0 0
        %1063 = vmatpush1.bf16.msra.mxu0 %v1055
        %1064 = vmatprep.subr.bf16.mxu0 0
        %1065 = vmatpush1.bf16.msra.mxu0 %v1056
        %1066 = vmatprep.subr.bf16.mxu0 0
        %1067 = vmatpush1.bf16.msra.mxu0 0
        %1068 = vmatprep.subr.bf16.mxu0 0
        %1069 = vmatpush1.bf16.msra.mxu0 0
        %1070 = vmatprep.subr.bf16.mxu0 0
        %1071 = vmatpush1.bf16.msra.mxu0 0
        %1072 = vmatprep.subr.bf16.mxu0 0
        %1073 = vmatpush1.bf16.msra.mxu0 0
        %1074 = vmatprep.subr.bf16.mxu0 0
        %1075 = vmatpush1.bf16.msra.mxu0 0
        %1076 = vmatprep.subr.bf16.mxu0 0
        %1077 = vmatpush1.bf16.msra.mxu0 0
        %1078 = vmatprep.subr.bf16.mxu0 0
        %1079 = vmatpush1.bf16.msra.mxu0 0
        %1080 = vmatprep.subr.bf16.mxu0 0
        %1081 = vmatpush1.bf16.msra.mxu0 0
        %1082 = vmatprep.subr.bf16.mxu0 0
        %1083 = vmatpush1.bf16.msra.mxu0 0
        %1084 = vmatprep.subr.bf16.mxu0 0
        %1085 = vmatpush1.bf16.msra.mxu0 0
        %1086 = vmatprep.subr.bf16.mxu0 0
        %1087 = vmatpush1.bf16.msra.mxu0 0
        %1088 = vmatprep.subr.bf16.mxu0 0
        %1089 = vmatpush1.bf16.msra.mxu0 0
        %1090 = vmatprep.subr.bf16.mxu0 0
        %1091 = vmatpush1.bf16.msra.mxu0 0
        %1092 = vmatprep.subr.bf16.mxu0 0
        %1093 = vmatpush1.bf16.msra.mxu0 0
        %1094 = vmatprep.mubr.bf16.mxu0 0
        %1095 = vmatmul.mubr.bf16.gmra.mrb[0].mxu0 %v1060
        %v1096 = vpop.f32.mrb[0].mxu0
        %v1097 = vadd.f32 %v1045, %v1096
        %v1098 = vpop.f32.mrb[0].mxu0
        %v1099 = vpop.f32.mrb[0].mxu0
        %v1100 = vadd.f32 %v1045, %v1099
        %v1101 = vpop.f32.mrb[0].mxu0
        %1102 = vdwg.mxu0
        %v1103 = vmul.f32 %v1097, 0.5
        %v1104 = vmul.f32 %v1100, 0.5
        %v1105 = vmul.f32 %v1097, 0.044715
        %v1106 = vmul.f32 %v1100, 0.044715
        %v1107 = vmul.f32 %v1105, %v1097
        %v1108 = vmul.f32 %v1106, %v1100
        %v1109 = vmul.f32 %v1107, %v1097
        %v1110 = vmul.f32 %v1108, %v1100
        %v1111 = vadd.f32 %v1097, %v1109
        %v1112 = vadd.f32 %v1100, %v1110
        %v1113 = vmul.f32 %v1111, 0.7978846
        %v1114 = vmul.f32 %v1112, 0.7978846
        %v1115 = vtanh.pop %v1113
        %v1116 = vtanh.pop %v1114
        %v1117 = vadd.f32 %v1115, 1.0
        %v1118 = vadd.f32 %v1116, 1.0
        %v1119 = vmul.f32 %v1103, %v1117
        %v1120 = vmul.f32 %v1104, %v1118
        %v1121 = vpack.c.bf16 %v1120, %v1119
        %v1122 = vld [vmem:[%s7] sm:$0xf]
        %v1123 = vld [vmem:[%s7 + $0x4] sm:$0xf]
        %v1124 = vld [vmem:[%s7 + $0x8] sm:$0xf]
        %v1125 = vld [vmem:[%s7 + $0xc] sm:$0xf]
        %v1126 = vld [vmem:[%s7 + $0x10] sm:$0xf]
        %v1127 = vld [vmem:[%s7 + $0x14] sm:$0xf]
        %v1128 = vld [vmem:[%s7 + $0x18] sm:$0xf]
        %v1129 = vld [vmem:[%s7 + $0x1c] sm:$0xf]
        %v1130 = vld [vmem:[%s7 + $0x20] sm:$0xf]
        %v1131 = vld [vmem:[%s7 + $0x24] sm:$0xf]
        %v1132 = vld [vmem:[%s7 + $0x28] sm:$0xf]
        %v1133 = vld [vmem:[%s7 + $0x2c] sm:$0xf]
        %v1134 = vld [vmem:[%s7 + $0x30] sm:$0xf]
        %v1135 = vld [vmem:[%s7 + $0x34] sm:$0xf]
        %v1136 = vld [vmem:[%s7 + $0x38] sm:$0xf]
        %v1137 = vld [vmem:[%s7 + $0x3c] sm:$0xf]
        %v1138 = vld [vmem:[%s8] sm:$0x1]
        %v1140 = vlaneseq
        %v1141 = vshrl.u32 %v1140, 7
        %v1142 = vsub.s32 0, %v1141
        %v1143 = vrot.slane %v1138, %v1142
        %v1161 = vunpack.c.l.b16 %v1122
        %v1162 = vunpack.c.l.b16 %v1123
        %v1163 = vunpack.c.l.b16 %v1124
        %v1164 = vunpack.c.l.b16 %v1125
        %v1165 = vunpack.c.l.b16 %v1126
        %v1166 = vunpack.c.l.b16 %v1127
        %v1167 = vunpack.c.l.b16 %v1128
        %v1168 = vunpack.c.l.b16 %v1129
        %v1169 = vunpack.c.l.b16 %v1130
        %v1170 = vunpack.c.l.b16 %v1131
        %v1171 = vunpack.c.l.b16 %v1132
        %v1172 = vunpack.c.l.b16 %v1133
        %v1173 = vunpack.c.l.b16 %v1134
        %v1174 = vunpack.c.l.b16 %v1135
        %v1175 = vunpack.c.l.b16 %v1136
        %v1176 = vunpack.c.l.b16 %v1137
        %v1177 = vpack.c.b16 %v1162, %v1161
        %v1178 = vpack.c.b16 %v1164, %v1163
        %v1179 = vpack.c.b16 %v1166, %v1165
        %v1180 = vpack.c.b16 %v1168, %v1167
        %v1181 = vpack.c.b16 %v1170, %v1169
        %v1182 = vpack.c.b16 %v1172, %v1171
        %v1183 = vpack.c.b16 %v1174, %v1173
        %v1184 = vpack.c.b16 %v1176, %v1175
        %1193 = vmatprep.subr.bf16.mxu0 0
        %1194 = vmatpush1.bf16.msra.mxu0 %v1177
        %1195 = vmatprep.subr.bf16.mxu0 0
        %1196 = vmatpush1.bf16.msra.mxu0 %v1178
        %1197 = vmatprep.subr.bf16.mxu0 0
        %1198 = vmatpush1.bf16.msra.mxu0 %v1179
        %1199 = vmatprep.subr.bf16.mxu0 0
        %1200 = vmatpush1.bf16.msra.mxu0 %v1180
        %1201 = vmatprep.subr.bf16.mxu0 0
        %1202 = vmatpush1.bf16.msra.mxu0 %v1181
        %1203 = vmatprep.subr.bf16.mxu0 0
        %1204 = vmatpush1.bf16.msra.mxu0 %v1182
        %1205 = vmatprep.subr.bf16.mxu0 0
        %1206 = vmatpush1.bf16.msra.mxu0 %v1183
        %1207 = vmatprep.subr.bf16.mxu0 0
        %1208 = vmatpush1.bf16.msra.mxu0 %v1184
        %1209 = vmatprep.subr.bf16.mxu0 0
        %1210 = vmatpush1.bf16.msra.mxu0 0
        %1211 = vmatprep.subr.bf16.mxu0 0
        %1212 = vmatpush1.bf16.msra.mxu0 0
        %1213 = vmatprep.subr.bf16.mxu0 0
        %1214 = vmatpush1.bf16.msra.mxu0 0
        %1215 = vmatprep.subr.bf16.mxu0 0
        %1216 = vmatpush1.bf16.msra.mxu0 0
        %1217 = vmatprep.subr.bf16.mxu0 0
        %1218 = vmatpush1.bf16.msra.mxu0 0
        %1219 = vmatprep.subr.bf16.mxu0 0
        %1220 = vmatpush1.bf16.msra.mxu0 0
        %1221 = vmatprep.subr.bf16.mxu0 0
        %1222 = vmatpush1.bf16.msra.mxu0 0
        %1223 = vmatprep.subr.bf16.mxu0 0
        %1224 = vmatpush1.bf16.msra.mxu0 0
        %1225 = vmatprep.mubr.bf16.mxu0 0
        %1226 = vmatmul.mubr.bf16.gmra.mrb[0].mxu0 %v1121
        %v1227 = vpop.f32.mrb[0].mxu0
        %v1228 = vadd.f32 %v1143, %v1227
        %v1229 = vpop.f32.mrb[0].mxu0
        %v1230 = vpop.f32.mrb[0].mxu0
        %v1231 = vadd.f32 %v1143, %v1230
        %v1232 = vpop.f32.mrb[0].mxu0
        %1233 = vdwg.mxu0
        %v1234 = vadd.f32 %v1007, %v1228
        %v1235 = vadd.f32 %v1008, %v1231
        %1236 = vst.msk [vmem:[%s325] sm:$0xff] %vm334, %v1234
        %1237 = vst.msk [vmem:[%s325 + $0x8] sm:$0xff] %vm334, %v1235
        %s1238 = sand.u32 %s225, 1
        %s1239 = scalar_lea.sflag [#allocation4], %s1238
        %s1240 = sand.u32 %s225, 1
        %s1241 = smul.addr %s1240, 16
        %s1242 = scalar_lea.vmem [#allocation3], %s1241
        // Predicated region
        $region57: #{tpu_custom_call.1} parent=55 // pred_check
          %p1243 = pneg %p235
        $region58: #{tpu_custom_call.1} parent=55 // pred_check_branch
          %1245 = sbr.rel (%p1243) target = $region60
        $region59: #{tpu_custom_call.1} parent=55 // pred_region
          %s1247 = ssub.s32 256, 256
          %1248 = vsyncadd %s1239, %s1247
          %s1249 = smul.addr %s23, 2
          %s1250 = smul.addr %s1249, 128
          %s1251 = scalar_lea.hbm %s9, %s1250
          %s1252 = sshll.u32 %s1242, 4
          %s1253 = int_to_ptr.vmem [resolvable:$true] %s1252
          %1258 = dma.vmem_to_hbm [thread:$0]  %s1253, 256, %s1251, %s1239, 128, 128, 8
        $region60: #{tpu_custom_call.1} parent=55 // pred_fallthru
          _
      $region56: #{tpu_custom_call.1} parent=5 // pred_fallthru
        _
      %p1259 = scmp.le.s32.totalorder 2, %s18
      // Predicated region
      $region61: #{tpu_custom_call.1} parent=5 // pred_check
        %p1260 = pneg %p1259
      $region62: #{tpu_custom_call.1} parent=5 // pred_check_branch
        %1262 = sbr.rel (%p1260) target = $region64
      $region63: #{tpu_custom_call.1} parent=5 // pred_region
        %s1263 = ssub.s32 %s18, 2
        // Predicated region
        $region65: #{tpu_custom_call.1} parent=63 // pred_check
          %p1264 = pneg %p241
        $region66: #{tpu_custom_call.1} parent=63 // pred_check_branch
          %1266 = sbr.rel (%p1264) target = $region68
        $region67: #{tpu_custom_call.1} parent=63 // pred_region
          %s1267 = sand.u32 %s226, 1
          %s1268 = scalar_lea.sflag [#allocation4], %s1267
          %s1269 = sand.u32 %s226, 1
          %s1270 = smul.addr %s1269, 16
          %s1271 = scalar_lea.vmem [#allocation3], %s1270
          %1272 = dma.done %s1268, 256
        $region68: #{tpu_custom_call.1} parent=63 // pred_fallthru
          _
      $region64: #{tpu_custom_call.1} parent=5 // pred_fallthru
        _
    $region6: #{tpu_custom_call.1} parent=1 // loop_footer
      %s22 = sadd.s32 1, %s18
    $region7: #{tpu_custom_call.1} parent=1 // loop_footer_branch
      %17 = sbr.rel target = $region3
    $region8: #{tpu_custom_call.1} parent=1 // loop_exit
      _
    %1273 = vsyncpa [#allocation4], 1
    %s1274 = scalar_lea.sflag [#allocation4], 1
    %1275 = vsyncpa %s1274, 1

</llo_original>
